<compile_context>
chip_gen: v6e
topology: v6e:2x2x1
jax: 0.10.0
libtpu: 0.0.40
codegen_flags: <defaults>
</compile_context>

<pallas_src>
import functools

import jax
import jax.numpy as jnp
from jax.experimental import pallas as pl
from jax.experimental.pallas import tpu as pltpu


def _round_up(x, m):
    return (x + m - 1) // m * m


def _pick_batch_tile(n):
    # Keep >=2 grid steps when possible (both v7x TensorCores), but fold a few
    # batch elements per step for larger N to amortize per-step overhead.
    if n <= 3:
        return 1
    for bt in (4, 3, 2):
        if n % bt == 0 and n // bt >= 2:
            return bt
    return 1


def _conv_in_relu_kernel(x_ref, w_ref, mask_ref, o_ref, *,
                         taps, stride, m_pad, hw_valid, apply_relu, eps,
                         mxu_dtype):
    # x_ref:    (Bt, C_in, L)        zero-padded flattened input (+ slack)
    # w_ref:    (k*k, C_out, C_in)   per-tap weight matrices
    # mask_ref: (1, m_pad)           1.0 on valid output columns, else 0.0
    # o_ref:    (Bt, C_out, m_pad)   lane-dense output
    mask = mask_ref[...]
    inv_hw = 1.0 / float(hw_valid)
    bt, c_out = o_ref.shape[0], o_ref.shape[1]

    for b in range(bt):                       # static unroll over batch tile
        xb = x_ref[b]                         # (C_in, L)
        acc = jnp.zeros((c_out, m_pad), jnp.float32)
        for t, off in enumerate(taps):        # k*k shifted-slice matmuls (MXU)
            if stride == 1:
                xs = xb[:, off:off + m_pad]
            else:
                xs = xb[:, off:off + stride * m_pad:stride]
            wt = w_ref[t]                     # (C_out, C_in)
            if mxu_dtype is not None:
                wt = wt.astype(mxu_dtype)
                xs = xs.astype(mxu_dtype)
            acc = acc + jnp.dot(wt, xs, preferred_element_type=jnp.float32)

        # InstanceNorm2d (affine=False, biased variance, eps inside rsqrt),
        # computed over the valid spatial positions only; garbage columns are
        # masked out of the statistics and sliced away by the wrapper.
        y_valid = acc * mask
        mean = jnp.sum(y_valid, axis=-1, keepdims=True) * inv_hw
        cen = (acc - mean) * mask
        var = jnp.sum(cen * cen, axis=-1, keepdims=True) * inv_hw
        y = (acc - mean) * jax.lax.rsqrt(var + eps)
        if apply_relu:
            y = jnp.maximum(y, 0.0)
        o_ref[b] = y.astype(o_ref.dtype)


def conv_layer(x, weight, *, stride, padding, r=True, eps=1e-5, mxu_dtype=None):
    """x: (N, C_in, H, W) f32, weight: (C_out, C_in, k, k) f32 -> NCHW output."""
    n, c_in, h, w = x.shape
    c_out, _, k, _ = weight.shape
    h_pad, w_pad = h + 2 * padding, w + 2 * padding
    h_out = (h_pad - k) // stride + 1
    w_out = (w_pad - k) // stride + 1
    hw_valid = h_out * w_out

    # The kernel computes full padded-width rows: M = H_out * W_pad columns,
    # rounded up to a lane multiple so stores are unmasked.
    m = h_out * w_pad
    m_pad = _round_up(m, 128)

    # Per-tap lane offsets into the flattened padded image; the pixel needed
    # for output position m' = i*W_pad + j under tap (di, dj) sits at
    # flat index  di*W_pad + dj + stride*m'.
    taps = tuple(di * w_pad + dj for di in range(k) for dj in range(k))
    l_needed = max(taps) + stride * (m_pad - 1) + 1
    l_flat = _round_up(max(l_needed, h_pad * w_pad), 128)

    # Zero-pad spatially, flatten, and add slack so every shifted slice stays
    # in bounds (slack reads are zeros and masked out of the statistics).
    xp = jnp.pad(x, ((0, 0), (0, 0), (padding, padding), (padding, padding)))
    xf = xp.reshape(n, c_in, h_pad * w_pad)
    xf = jnp.pad(xf, ((0, 0), (0, 0), (0, l_flat - h_pad * w_pad)))

    # (C_out, C_in, kh, kw) -> (k*k, C_out, C_in), tap index t = di*k + dj.
    w_taps = jnp.transpose(weight, (2, 3, 0, 1)).reshape(k * k, c_out, c_in)

    # Valid-output-column mask over the m_pad lanes.
    lane = jnp.arange(m_pad)
    mask = (((lane % w_pad) < w_out) & (lane < m)).astype(jnp.float32)
    mask = mask.reshape(1, m_pad)

    bt = _pick_batch_tile(n)
    grid = (n // bt,)

    kernel = functools.partial(
        _conv_in_relu_kernel, taps=taps, stride=stride, m_pad=m_pad,
        hw_valid=hw_valid, apply_relu=r, eps=eps, mxu_dtype=mxu_dtype)

    # TODO(synk): for very large H*W the (Bt, C_out, m_pad) block should be
    # HW-tiled with a two-pass norm to respect v7x's smaller (64 MiB) VMEM.
    out = pl.pallas_call(
        kernel,
        out_shape=jax.ShapeDtypeStruct((n, c_out, m_pad), x.dtype),
        grid_spec=pltpu.PrefetchScalarGridSpec(
            num_scalar_prefetch=0,
            grid=grid,
            in_specs=[
                pl.BlockSpec((bt, c_in, l_flat), lambda i: (i, 0, 0)),
                pl.BlockSpec((k * k, c_out, c_in), lambda i: (0, 0, 0)),
                pl.BlockSpec((1, m_pad), lambda i: (0, 0)),
            ],
            out_specs=pl.BlockSpec((bt, c_out, m_pad), lambda i: (i, 0, 0)),
        ),
        compiler_params=pltpu.CompilerParams(
            dimension_semantics=("parallel",),
            vmem_limit_bytes=64 << 20),
    )(xf, w_taps, mask)

    # (N, C_out, m_pad) -> (N, C_out, H_out, W_out): drop garbage columns.
    out = out[:, :, :m].reshape(n, c_out, h_out, w_pad)[:, :, :, :w_out]
    return out


def _reference(x, weight, *, stride, padding, r=True, eps=1e-5):
    y = jax.lax.conv_general_dilated(
        x, weight, window_strides=(stride, stride),
        padding=[(padding, padding), (padding, padding)],
        dimension_numbers=("NCHW", "OIHW", "NCHW"))
    mean = jnp.mean(y, axis=(2, 3), keepdims=True)
    var = jnp.mean((y - mean) ** 2, axis=(2, 3), keepdims=True)
    y = (y - mean) * jax.lax.rsqrt(var + eps)
    return jnp.maximum(y, 0.0) if r else y


if __name__ == "__main__":
    # Module config: ConvLayer(in_channels=4, out_channels=8, kernel_size=3,
    #                          stride=1, padding=1, r=True)
    in_channels, out_channels, kernel_size, stride, padding = 4, 8, 3, 1, 1
    batch, height, width = 2, 16, 16

    key = jax.random.PRNGKey(0)
    kx, kw = jax.random.split(key)
    x = jax.random.normal(kx, (batch, in_channels, height, width), jnp.float32)
    # Deterministic Kaiming-uniform-like init for Conv2d weight (bias=False).
    fan_in = in_channels * kernel_size * kernel_size
    bound = (1.0 / fan_in) ** 0.5
    weight = jax.random.uniform(
        kw, (out_channels, in_channels, kernel_size, kernel_size),
        jnp.float32, minval=-bound, maxval=bound)

    out = conv_layer(x, weight, stride=stride, padding=padding, r=True)
    out = jax.block_until_ready(out)

    ref = _reference(x, weight, stride=stride, padding=padding, r=True)
    assert out.shape == (batch, out_channels, height, width)
    assert jnp.allclose(out, ref, atol=1e-4, rtol=1e-4)

    print("KERNEL_OK")
</pallas_src>

<mosaic_0001>
module attributes {stable_mosaic.version = 11 : i64} {
  func.func @_conv_in_relu_kernel(%arg0: i32, %arg1: memref<1x4x512xf32, #tpu.memory_space<vmem>>, %arg2: memref<9x8x4xf32, #tpu.memory_space<vmem>>, %arg3: memref<1x384xf32, #tpu.memory_space<vmem>>, %arg4: memref<1x8x384xf32, #tpu.memory_space<vmem>>) attributes {dimension_semantics = [#tpu.dimension_semantics<parallel>], iteration_bounds = array<i64: 2>, scalar_prefetch = 0 : i64, scratch_operands = 0 : i64, tpu.core_type = #tpu.core_type<tc>, window_params = [{transform_indices = @transform_0, window_bounds = array<i64: 1, 4, 512>}, {pipeline_mode = #tpu.pipeline_mode<synchronous>, transform_indices = @transform_1, window_bounds = array<i64: 9, 8, 4>}, {pipeline_mode = #tpu.pipeline_mode<synchronous>, transform_indices = @transform_2, window_bounds = array<i64: 1, 384>}, {transform_indices = @transform_3, window_bounds = array<i64: 1, 8, 384>}]} {
    %c0 = arith.constant 0 : index
    %c0_0 = arith.constant 0 : index
    %0 = vector.load %arg3[%c0, %c0_0] : memref<1x384xf32, #tpu.memory_space<vmem>>, vector<1x384xf32>
    %c0_1 = arith.constant 0 : index
    %c0_2 = arith.constant 0 : index
    %c0_3 = arith.constant 0 : index
    %1 = vector.load %arg1[%c0_1, %c0_2, %c0_3] : memref<1x4x512xf32, #tpu.memory_space<vmem>>, vector<1x4x512xf32>
    %2 = vector.shape_cast %1 : vector<1x4x512xf32> to vector<4x512xf32>
    %cst = arith.constant 0.000000e+00 : f32
    %3 = vector.broadcast %cst : f32 to vector<8x384xf32>
    %4 = vector.extract_strided_slice %2 {offsets = [0, 0], sizes = [4, 384], strides = [1, 1]} : vector<4x512xf32> to vector<4x384xf32>
    %c0_4 = arith.constant 0 : index
    %c0_5 = arith.constant 0 : index
    %c0_6 = arith.constant 0 : index
    %5 = vector.load %arg2[%c0_4, %c0_5, %c0_6] : memref<9x8x4xf32, #tpu.memory_space<vmem>>, vector<1x8x4xf32>
    %6 = vector.shape_cast %5 : vector<1x8x4xf32> to vector<8x4xf32>
    %cst_7 = arith.constant dense<0.000000e+00> : vector<8x384xf32>
    %7 = tpu.matmul %6, %4, %cst_7 {dimension_numbers = #tpu.dot_dimension_numbers<[1], [0], [0], [1], [0, 0, 1, 1], [], []>} : vector<8x4xf32>, vector<4x384xf32>, vector<8x384xf32> -> vector<8x384xf32>
    %8 = arith.addf %3, %7 : vector<8x384xf32>
    %9 = vector.extract_strided_slice %2 {offsets = [0, 1], sizes = [4, 384], strides = [1, 1]} : vector<4x512xf32> to vector<4x384xf32>
    %c1 = arith.constant 1 : index
    %c0_8 = arith.constant 0 : index
    %c0_9 = arith.constant 0 : index
    %10 = vector.load %arg2[%c1, %c0_8, %c0_9] : memref<9x8x4xf32, #tpu.memory_space<vmem>>, vector<1x8x4xf32>
    %11 = vector.shape_cast %10 : vector<1x8x4xf32> to vector<8x4xf32>
    %cst_10 = arith.constant dense<0.000000e+00> : vector<8x384xf32>
    %12 = tpu.matmul %11, %9, %cst_10 {dimension_numbers = #tpu.dot_dimension_numbers<[1], [0], [0], [1], [0, 0, 1, 1], [], []>} : vector<8x4xf32>, vector<4x384xf32>, vector<8x384xf32> -> vector<8x384xf32>
    %13 = arith.addf %8, %12 : vector<8x384xf32>
    %14 = vector.extract_strided_slice %2 {offsets = [0, 2], sizes = [4, 384], strides = [1, 1]} : vector<4x512xf32> to vector<4x384xf32>
    %c2 = arith.constant 2 : index
    %c0_11 = arith.constant 0 : index
    %c0_12 = arith.constant 0 : index
    %15 = vector.load %arg2[%c2, %c0_11, %c0_12] : memref<9x8x4xf32, #tpu.memory_space<vmem>>, vector<1x8x4xf32>
    %16 = vector.shape_cast %15 : vector<1x8x4xf32> to vector<8x4xf32>
    %cst_13 = arith.constant dense<0.000000e+00> : vector<8x384xf32>
    %17 = tpu.matmul %16, %14, %cst_13 {dimension_numbers = #tpu.dot_dimension_numbers<[1], [0], [0], [1], [0, 0, 1, 1], [], []>} : vector<8x4xf32>, vector<4x384xf32>, vector<8x384xf32> -> vector<8x384xf32>
    %18 = arith.addf %13, %17 : vector<8x384xf32>
    %19 = vector.extract_strided_slice %2 {offsets = [0, 18], sizes = [4, 384], strides = [1, 1]} : vector<4x512xf32> to vector<4x384xf32>
    %c3 = arith.constant 3 : index
    %c0_14 = arith.constant 0 : index
    %c0_15 = arith.constant 0 : index
    %20 = vector.load %arg2[%c3, %c0_14, %c0_15] : memref<9x8x4xf32, #tpu.memory_space<vmem>>, vector<1x8x4xf32>
    %21 = vector.shape_cast %20 : vector<1x8x4xf32> to vector<8x4xf32>
    %cst_16 = arith.constant dense<0.000000e+00> : vector<8x384xf32>
    %22 = tpu.matmul %21, %19, %cst_16 {dimension_numbers = #tpu.dot_dimension_numbers<[1], [0], [0], [1], [0, 0, 1, 1], [], []>} : vector<8x4xf32>, vector<4x384xf32>, vector<8x384xf32> -> vector<8x384xf32>
    %23 = arith.addf %18, %22 : vector<8x384xf32>
    %24 = vector.extract_strided_slice %2 {offsets = [0, 19], sizes = [4, 384], strides = [1, 1]} : vector<4x512xf32> to vector<4x384xf32>
    %c4 = arith.constant 4 : index
    %c0_17 = arith.constant 0 : index
    %c0_18 = arith.constant 0 : index
    %25 = vector.load %arg2[%c4, %c0_17, %c0_18] : memref<9x8x4xf32, #tpu.memory_space<vmem>>, vector<1x8x4xf32>
    %26 = vector.shape_cast %25 : vector<1x8x4xf32> to vector<8x4xf32>
    %cst_19 = arith.constant dense<0.000000e+00> : vector<8x384xf32>
    %27 = tpu.matmul %26, %24, %cst_19 {dimension_numbers = #tpu.dot_dimension_numbers<[1], [0], [0], [1], [0, 0, 1, 1], [], []>} : vector<8x4xf32>, vector<4x384xf32>, vector<8x384xf32> -> vector<8x384xf32>
    %28 = arith.addf %23, %27 : vector<8x384xf32>
    %29 = vector.extract_strided_slice %2 {offsets = [0, 20], sizes = [4, 384], strides = [1, 1]} : vector<4x512xf32> to vector<4x384xf32>
    %c5 = arith.constant 5 : index
    %c0_20 = arith.constant 0 : index
    %c0_21 = arith.constant 0 : index
    %30 = vector.load %arg2[%c5, %c0_20, %c0_21] : memref<9x8x4xf32, #tpu.memory_space<vmem>>, vector<1x8x4xf32>
    %31 = vector.shape_cast %30 : vector<1x8x4xf32> to vector<8x4xf32>
    %cst_22 = arith.constant dense<0.000000e+00> : vector<8x384xf32>
    %32 = tpu.matmul %31, %29, %cst_22 {dimension_numbers = #tpu.dot_dimension_numbers<[1], [0], [0], [1], [0, 0, 1, 1], [], []>} : vector<8x4xf32>, vector<4x384xf32>, vector<8x384xf32> -> vector<8x384xf32>
    %33 = arith.addf %28, %32 : vector<8x384xf32>
    %34 = vector.extract_strided_slice %2 {offsets = [0, 36], sizes = [4, 384], strides = [1, 1]} : vector<4x512xf32> to vector<4x384xf32>
    %c6 = arith.constant 6 : index
    %c0_23 = arith.constant 0 : index
    %c0_24 = arith.constant 0 : index
    %35 = vector.load %arg2[%c6, %c0_23, %c0_24] : memref<9x8x4xf32, #tpu.memory_space<vmem>>, vector<1x8x4xf32>
    %36 = vector.shape_cast %35 : vector<1x8x4xf32> to vector<8x4xf32>
    %cst_25 = arith.constant dense<0.000000e+00> : vector<8x384xf32>
    %37 = tpu.matmul %36, %34, %cst_25 {dimension_numbers = #tpu.dot_dimension_numbers<[1], [0], [0], [1], [0, 0, 1, 1], [], []>} : vector<8x4xf32>, vector<4x384xf32>, vector<8x384xf32> -> vector<8x384xf32>
    %38 = arith.addf %33, %37 : vector<8x384xf32>
    %39 = vector.extract_strided_slice %2 {offsets = [0, 37], sizes = [4, 384], strides = [1, 1]} : vector<4x512xf32> to vector<4x384xf32>
    %c7 = arith.constant 7 : index
    %c0_26 = arith.constant 0 : index
    %c0_27 = arith.constant 0 : index
    %40 = vector.load %arg2[%c7, %c0_26, %c0_27] : memref<9x8x4xf32, #tpu.memory_space<vmem>>, vector<1x8x4xf32>
    %41 = vector.shape_cast %40 : vector<1x8x4xf32> to vector<8x4xf32>
    %cst_28 = arith.constant dense<0.000000e+00> : vector<8x384xf32>
    %42 = tpu.matmul %41, %39, %cst_28 {dimension_numbers = #tpu.dot_dimension_numbers<[1], [0], [0], [1], [0, 0, 1, 1], [], []>} : vector<8x4xf32>, vector<4x384xf32>, vector<8x384xf32> -> vector<8x384xf32>
    %43 = arith.addf %38, %42 : vector<8x384xf32>
    %44 = vector.extract_strided_slice %2 {offsets = [0, 38], sizes = [4, 384], strides = [1, 1]} : vector<4x512xf32> to vector<4x384xf32>
    %c8 = arith.constant 8 : index
    %c0_29 = arith.constant 0 : index
    %c0_30 = arith.constant 0 : index
    %45 = vector.load %arg2[%c8, %c0_29, %c0_30] : memref<9x8x4xf32, #tpu.memory_space<vmem>>, vector<1x8x4xf32>
    %46 = vector.shape_cast %45 : vector<1x8x4xf32> to vector<8x4xf32>
    %cst_31 = arith.constant dense<0.000000e+00> : vector<8x384xf32>
    %47 = tpu.matmul %46, %44, %cst_31 {dimension_numbers = #tpu.dot_dimension_numbers<[1], [0], [0], [1], [0, 0, 1, 1], [], []>} : vector<8x4xf32>, vector<4x384xf32>, vector<8x384xf32> -> vector<8x384xf32>
    %48 = arith.addf %43, %47 : vector<8x384xf32>
    %49 = vector.broadcast %0 : vector<1x384xf32> to vector<8x384xf32>
    %50 = arith.mulf %48, %49 : vector<8x384xf32>
    %cst_32 = arith.constant dense<0.000000e+00> : vector<8xf32>
    %51 = vector.multi_reduction <add>, %50, %cst_32 [1] : vector<8x384xf32> to vector<8xf32>
    %52 = vector.shape_cast %51 : vector<8xf32> to vector<8x1xf32>
    %cst_33 = arith.constant 3.906250e-03 : f32
    %53 = vector.broadcast %cst_33 : f32 to vector<8x1xf32>
    %54 = arith.mulf %52, %53 : vector<8x1xf32>
    %55 = vector.broadcast %54 : vector<8x1xf32> to vector<8x384xf32>
    %56 = arith.subf %48, %55 : vector<8x384xf32>
    %57 = vector.broadcast %0 : vector<1x384xf32> to vector<8x384xf32>
    %58 = arith.mulf %56, %57 : vector<8x384xf32>
    %59 = arith.mulf %58, %58 : vector<8x384xf32>
    %cst_34 = arith.constant dense<0.000000e+00> : vector<8xf32>
    %60 = vector.multi_reduction <add>, %59, %cst_34 [1] : vector<8x384xf32> to vector<8xf32>
    %61 = vector.shape_cast %60 : vector<8xf32> to vector<8x1xf32>
    %cst_35 = arith.constant 3.906250e-03 : f32
    %62 = vector.broadcast %cst_35 : f32 to vector<8x1xf32>
    %63 = arith.mulf %61, %62 : vector<8x1xf32>
    %64 = vector.broadcast %54 : vector<8x1xf32> to vector<8x384xf32>
    %65 = arith.subf %48, %64 : vector<8x384xf32>
    %cst_36 = arith.constant 9.99999974E-6 : f32
    %66 = vector.broadcast %cst_36 : f32 to vector<8x1xf32>
    %67 = arith.addf %63, %66 : vector<8x1xf32>
    %68 = math.rsqrt %67 : vector<8x1xf32>
    %69 = vector.broadcast %68 : vector<8x1xf32> to vector<8x384xf32>
    %70 = arith.mulf %65, %69 : vector<8x384xf32>
    %cst_37 = arith.constant 0.000000e+00 : f32
    %71 = vector.broadcast %cst_37 : f32 to vector<8x384xf32>
    %72 = arith.maximumf %70, %71 : vector<8x384xf32>
    %c0_38 = arith.constant 0 : index
    %c0_39 = arith.constant 0 : index
    %c0_40 = arith.constant 0 : index
    %73 = vector.load %arg4[%c0_38, %c0_39, %c0_40] : memref<1x8x384xf32, #tpu.memory_space<vmem>>, vector<1x8x384xf32>
    %74 = vector.shape_cast %73 : vector<1x8x384xf32> to vector<8x384xf32>
    %75 = vector.shape_cast %72 : vector<8x384xf32> to vector<1x8x384xf32>
    tpu.vector_store %arg4[%c0_38, %c0_39, %c0_40], %75 {strides = array<i32>} : memref<1x8x384xf32, #tpu.memory_space<vmem>>, vector<1x8x384xf32>,
    return
  }
  func.func @transform_0(%arg0: i32) -> (i32, i32, i32) {
    %c0_i32 = arith.constant 0 : i32
    %c0_i32_0 = arith.constant 0 : i32
    %c0_i32_1 = arith.constant 0 : i32
    return %arg0, %c0_i32, %c0_i32_0 : i32, i32, i32
  }
  func.func @transform_1(%arg0: i32) -> (i32, i32, i32) {
    %c0_i32 = arith.constant 0 : i32
    %c0_i32_0 = arith.constant 0 : i32
    %c0_i32_1 = arith.constant 0 : i32
    %c0_i32_2 = arith.constant 0 : i32
    return %c0_i32, %c0_i32_0, %c0_i32_1 : i32, i32, i32
  }
  func.func @transform_2(%arg0: i32) -> (i32, i32) {
    %c0_i32 = arith.constant 0 : i32
    %c0_i32_0 = arith.constant 0 : i32
    %c0_i32_1 = arith.constant 0 : i32
    return %c0_i32, %c0_i32_0 : i32, i32
  }
  func.func @transform_3(%arg0: i32) -> (i32, i32, i32) {
    %c0_i32 = arith.constant 0 : i32
    %c0_i32_0 = arith.constant 0 : i32
    %c0_i32_1 = arith.constant 0 : i32
    return %arg0, %c0_i32, %c0_i32_0 : i32, i32, i32
  }
}

</mosaic_0001>

<llo_original>
// kernel: tpu_custom_call.1
$region0: #{tpu_custom_call.1}
  #allocation0 [shape = 'u32[]', space=smem, size = 0x4, offset = 0x4, fixed_abs, tag = 'smem constant byte address 0x4 - core index']
  #allocation1 [shape = 'u32[144,128]{1,0:T(1,128)}', space=vmem, size = 0x12000, scoped, tag = 'internal scratch']
  %s0 = inlined_call_operand.vmem [shape: f32[2,4,512], index: 0, kind: input, shape index: {}]
  %s1 = inlined_call_operand.vmem [shape: f32[9,8,4], index: 1, kind: input, shape index: {}]
  %s2 = inlined_call_operand.vmem [shape: f32[1,384], index: 2, kind: input, shape index: {}]
  %s3 = inlined_call_operand.hbm [shape: f32[2,8,384], index: 3, kind: output, shape index: {}]
  %s4 = sld [smem:[#allocation0]]
  $region45: #{tpu_custom_call.1} parent=0
    _
  %s6 = ssub.s32 1, %s4
  %s7 = scalar_select 0, %s6, %s4
  $region1: #{tpu_custom_call.1} parent=0
    #allocation2 [shape = 'u8[24576]{0}', space=vmem, size = 0x6000, scoped, tag = 'output window, operand 0']
    #allocation3 [shape = 's32[2]{0}', space=sflag, size = 0x8, scoped, tag = 'scoped memory for tpu_custom_call.1']
    %8 = vsyncpa [#allocation3], 0
    %s9 = scalar_lea.sflag [#allocation3], 1
    %10 = vsyncpa %s9, 0
    loop: start=0, step=1, limit=4
    $region2: #{tpu_custom_call.1} parent=1 // loop_pre_header
      _
    $region3: #{tpu_custom_call.1} parent=1 // loop_header
      %s12 = sphi 0, %s16
      %p13 = scmp.ge.s32.totalorder %s12, 4
      %s22 = sphi 0, %s24
      %s25 = sphi 0, %s22
      %s26 = sphi 0, %s25
      %s42 = sphi 0, %s26
      %s46 = sphi 0, %s46
      %s48 = sphi 0, %s46
      %s49 = sphi 0, %s48
      %s63 = sphi 0, %s49
      %s67 = sphi 0, %s67
      %s69 = sphi 0, %s67
      %s70 = sphi 0, %s69
      %s84 = sphi 0, %s70
      %s90 = sphi 0, %s92
      %s93 = sphi 0, %s90
      %s94 = sphi 0, %s93
      %s110 = sphi 0, %s94
    $region4: #{tpu_custom_call.1} parent=1 // loop_header_branch
      %15 = sbr.rel (%p13) target = $region8
    $region5: #{tpu_custom_call.1} parent=1 // loop_body
      %s17 = ssub.s32 %s12, 1
      %s18 = ssub.s32 %s12, 2
      %s19 = sadd.s32 %s12, 1
      %s20 = ssub.s32 %s12, %s19
      %p21 = scmp.eq.s32.totalorder %s20, 0
      %s23 = sadd.s32 %s22, 1
      %s24 = scalar_select %p21, %s22, %s23
      %p27 = pneg %p21
      %p28 = scmp.eq.s32.totalorder %s12, 1
      %p29 = por %p27, %p28
      %p30 = scmp.ne.s32.totalorder %s22, %s25
      %p31 = scmp.eq.s32.totalorder %s12, 0
      %p32 = por %p30, %p31
      %p33 = scmp.ne.s32.totalorder %s22, %s25
      %p34 = scmp.eq.s32.totalorder %s17, 1
      %p35 = por %p33, %p34
      %p36 = scmp.ne.s32.totalorder %s25, %s26
      %p37 = scmp.eq.s32.totalorder %s17, 0
      %p38 = por %p36, %p37
      %p39 = scmp.ne.s32.totalorder %s25, %s26
      %p40 = scmp.eq.s32.totalorder %s18, 1
      %p41 = por %p39, %p40
      %p43 = scmp.ne.s32.totalorder %s26, %s42
      %p44 = scmp.eq.s32.totalorder %s18, 0
      %p45 = por %p43, %p44
      %s47 = sadd.s32 %s46, 1
      %p50 = scmp.eq.s32.totalorder %s12, 1
      %p51 = scmp.ne.s32.totalorder %s46, %s48
      %p52 = scmp.eq.s32.totalorder %s12, 0
      %p53 = por %p51, %p52
      %p54 = scmp.ne.s32.totalorder %s46, %s48
      %p55 = scmp.eq.s32.totalorder %s17, 1
      %p56 = por %p54, %p55
      %p57 = scmp.ne.s32.totalorder %s48, %s49
      %p58 = scmp.eq.s32.totalorder %s17, 0
      %p59 = por %p57, %p58
      %p60 = scmp.ne.s32.totalorder %s48, %s49
      %p61 = scmp.eq.s32.totalorder %s18, 1
      %p62 = por %p60, %p61
      %p64 = scmp.ne.s32.totalorder %s49, %s63
      %p65 = scmp.eq.s32.totalorder %s18, 0
      %p66 = por %p64, %p65
      %s68 = sadd.s32 %s67, 1
      %p71 = scmp.eq.s32.totalorder %s12, 1
      %p72 = scmp.ne.s32.totalorder %s67, %s69
      %p73 = scmp.eq.s32.totalorder %s12, 0
      %p74 = por %p72, %p73
      %p75 = scmp.ne.s32.totalorder %s67, %s69
      %p76 = scmp.eq.s32.totalorder %s17, 1
      %p77 = por %p75, %p76
      %p78 = scmp.ne.s32.totalorder %s69, %s70
      %p79 = scmp.eq.s32.totalorder %s17, 0
      %p80 = por %p78, %p79
      %p81 = scmp.ne.s32.totalorder %s69, %s70
      %p82 = scmp.eq.s32.totalorder %s18, 1
      %p83 = por %p81, %p82
      %p85 = scmp.ne.s32.totalorder %s70, %s84
      %p86 = scmp.eq.s32.totalorder %s18, 0
      %p87 = por %p85, %p86
      %s88 = ssub.s32 %s12, %s19
      %p89 = scmp.eq.s32.totalorder %s88, 0
      %s91 = sadd.s32 %s90, 1
      %s92 = scalar_select %p89, %s90, %s91
      %p95 = pneg %p89
      %p96 = scmp.eq.s32.totalorder %s12, 1
      %p97 = por %p95, %p96
      %p98 = scmp.ne.s32.totalorder %s90, %s93
      %p99 = scmp.eq.s32.totalorder %s12, 0
      %p100 = por %p98, %p99
      %p101 = scmp.ne.s32.totalorder %s90, %s93
      %p102 = scmp.eq.s32.totalorder %s17, 1
      %p103 = por %p101, %p102
      %p104 = scmp.ne.s32.totalorder %s93, %s94
      %p105 = scmp.eq.s32.totalorder %s17, 0
      %p106 = por %p104, %p105
      %p107 = scmp.ne.s32.totalorder %s93, %s94
      %p108 = scmp.eq.s32.totalorder %s18, 1
      %p109 = por %p107, %p108
      %p111 = scmp.ne.s32.totalorder %s94, %s110
      %p112 = scmp.eq.s32.totalorder %s18, 0
      %p113 = por %p111, %p112
      %p114 = scmp.le.s32.totalorder 1, %s12
      %p115 = scmp.lt.s32.totalorder %s12, 3
      %p116 = pnand %p114, %p115
      %p117 = pneg %p116
      // Predicated region
      $region9: #{tpu_custom_call.1} parent=5 // pred_check
        _
      $region10: #{tpu_custom_call.1} parent=5 // pred_check_branch
        %119 = sbr.rel (%p116) target = $region12
      $region11: #{tpu_custom_call.1} parent=5 // pred_region
        %s120 = ssub.s32 %s12, 1
        // Predicated region
        $region13: #{tpu_custom_call.1} parent=11 // pred_check
          %p121 = pneg %p59
        $region14: #{tpu_custom_call.1} parent=11 // pred_check_branch
          %123 = sbr.rel (%p121) target = $region16
        $region15: #{tpu_custom_call.1} parent=11 // pred_region
          _
        $region16: #{tpu_custom_call.1} parent=11 // pred_fallthru
          _
        // Predicated region
        $region17: #{tpu_custom_call.1} parent=11 // pred_check
          %p124 = pneg %p80
        $region18: #{tpu_custom_call.1} parent=11 // pred_check_branch
          %126 = sbr.rel (%p124) target = $region20
        $region19: #{tpu_custom_call.1} parent=11 // pred_region
          _
        $region20: #{tpu_custom_call.1} parent=11 // pred_fallthru
          _
      $region12: #{tpu_custom_call.1} parent=5 // pred_fallthru
        _
      %p127 = scmp.lt.s32.totalorder %s12, 2
      // Predicated region
      $region21: #{tpu_custom_call.1} parent=5 // pred_check
        %p128 = pneg %p127
      $region22: #{tpu_custom_call.1} parent=5 // pred_check_branch
        %130 = sbr.rel (%p128) target = $region24
      $region23: #{tpu_custom_call.1} parent=5 // pred_region
        // Predicated region
        $region25: #{tpu_custom_call.1} parent=23 // pred_check
          %p131 = pneg %p32
        $region26: #{tpu_custom_call.1} parent=23 // pred_check_branch
          %133 = sbr.rel (%p131) target = $region28
        $region27: #{tpu_custom_call.1} parent=23 // pred_region
          %p134 = scmp.lt.s32.totalorder %s12, 1
          %s135 = scalar_select %p134, %s12, 1
          %s136 = smul.addr %s135, 4
          %s137 = smul.addr %s136, 4
          %s138 = scalar_lea.vmem %s0, %s137
        $region28: #{tpu_custom_call.1} parent=23 // pred_fallthru
          _
      $region24: #{tpu_custom_call.1} parent=5 // pred_fallthru
        _
      %p139 = scmp.le.s32.totalorder 1, %s12
      %p140 = scmp.lt.s32.totalorder %s12, 3
      %p141 = pnand %p139, %p140
      %p142 = pneg %p141
      // Predicated region
      $region29: #{tpu_custom_call.1} parent=5 // pred_check
        _
      $region30: #{tpu_custom_call.1} parent=5 // pred_check_branch
        %144 = sbr.rel (%p141) target = $region32
      $region31: #{tpu_custom_call.1} parent=5 // pred_region
        %s145 = ssub.s32 %s12, 1
        %p146 = scmp.lt.s32.totalorder %s17, 1
        %s147 = scalar_select %p146, %s17, 1
        %s148 = smul.addr %s147, 4
        %s149 = smul.addr %s148, 4
        %s150 = scalar_lea.vmem %s0, %s149
        %p151 = pneg %p38
        %p152 = pneg %p35
        %p153 = pneg %p59
        %p154 = pneg %p56
        %p155 = pneg %p80
        %p156 = pneg %p77
        %p157 = pneg %p106
        %p158 = pneg %p103
        %s159 = sand.u32 %s93, 1
        %s160 = scalar_lea.sflag [#allocation3], %s159
        %s161 = sand.u32 %s93, 1
        %s162 = smul.addr %s161, 24
        %s163 = scalar_lea.vmem [#allocation2], %s162
        %p164 = scmp.lt.s32.totalorder %s17, 1
        %s165 = scalar_select %p164, %s17, 1
        %s166 = smul.addr %s165, 4
        %s167 = smul.addr %s166, 4
        %s168 = scalar_lea.vmem %s0, %s167
        %v169 = vld [vmem:[%s2] sm:$0x7]
        %v170 = vld [vmem:[%s168] sm:$0xff]
        %v171 = vld [vmem:[%s168 + $0x8] sm:$0xff]
        %v172 = vld [vmem:[%s1] sm:$0xff]
        %s173 = scalar_lea.vmem %s1, 8
        %v174 = vld [vmem:[%s173] sm:$0xff]
        %v177 = vcombine.high %v170, %v170
        %v178 = vcombine.high %v171, %v171
        %179 = vrot.lane.b32.xlu0 %v170, 127
        %v180 = vpop.permute.xlu0 %179
        %181 = vrot.lane.b32.xlu0 %v177, 127
        %v182 = vpop.permute.xlu0 %181
        %183 = vrot.lane.b32.xlu0 %v171, 127
        %v184 = vpop.permute.xlu0 %183
        %185 = vrot.lane.b32.xlu0 %v178, 127
        %v186 = vpop.permute.xlu0 %185
        %vm187 = vcmask 1039360
        %v188 = vsel %vm187, %v180, %v182
        %v189 = vsel %vm187, %v182, %v184
        %v190 = vsel %vm187, %v184, %v186
        %vm191 = vcmask 31744
        %v193 = vsel %vm191, %v174, 0
        %vm195 = vcmask 1043456
        %v196 = vsel %vm195, %v188, 0
        %v198 = vsel %vm195, %v189, 0
        %v200 = vsel %vm195, %v190, 0
        %202 = vmatprep.subr.mxu0 0.0
        %203 = vmatpush1.msra.mxu0 0.0
        %204 = vmatprep.subr.mxu0 0.0
        %205 = vmatpush1.msra.mxu0 0.0
        %206 = vmatprep.subr.mxu0 0.0
        %207 = vmatpush1.msra.mxu0 0.0
        %208 = vmatprep.subr.mxu0 0.0
        %209 = vmatpush1.msra.mxu0 0.0
        %210 = vmatprep.subr.mxu0 0.0
        %211 = vmatpush1.msra.mxu0 0.0
        %212 = vmatprep.subr.mxu0 0.0
        %213 = vmatpush1.msra.mxu0 0.0
        %214 = vmatprep.subr.mxu0 0.0
        %215 = vmatpush1.msra.mxu0 0.0
        %216 = vmatprep.subr.mxu0 0.0
        %217 = vmatpush1.msra.mxu0 0.0
        %218 = vmatprep.subr.mxu0 0.0
        %219 = vmatpush1.msra.mxu0 0.0
        %220 = vmatprep.subr.mxu0 0.0
        %221 = vmatpush1.msra.mxu0 0.0
        %222 = vmatprep.subr.mxu0 0.0
        %223 = vmatpush1.msra.mxu0 0.0
        %224 = vmatprep.subr.mxu0 0.0
        %225 = vmatpush1.msra.mxu0 0.0
        %226 = vmatprep.subr.mxu0 0.0
        %227 = vmatpush1.msra.mxu0 0.0
        %228 = vmatprep.subr.mxu0 0.0
        %229 = vmatpush1.msra.mxu0 0.0
        %230 = vmatprep.subr.mxu0 0.0
        %231 = vmatpush1.msra.mxu0 0.0
        %232 = vmatprep.subr.mxu0 %v198
        %233 = vmatpush1.msra.mxu0 %v196
        %234 = vmatprep.subr.mxu0 0.0
        %235 = vmatpush2.msra.mxu0 0.0
        %236 = vmatprep.subr.mxu0 0.0
        %237 = vmatpush2.msra.mxu0 0.0
        %238 = vmatprep.subr.mxu0 0.0
        %239 = vmatpush2.msra.mxu0 0.0
        %240 = vmatprep.subr.mxu0 0.0
        %241 = vmatpush2.msra.mxu0 0.0
        %242 = vmatprep.subr.mxu0 0.0
        %243 = vmatpush2.msra.mxu0 0.0
        %244 = vmatprep.subr.mxu0 0.0
        %245 = vmatpush2.msra.mxu0 0.0
        %246 = vmatprep.subr.mxu0 0.0
        %247 = vmatpush2.msra.mxu0 0.0
        %248 = vmatprep.subr.mxu0 0.0
        %249 = vmatpush2.msra.mxu0 0.0
        %250 = vmatprep.subr.mxu0 0.0
        %251 = vmatpush2.msra.mxu0 0.0
        %252 = vmatprep.subr.mxu0 0.0
        %253 = vmatpush2.msra.mxu0 0.0
        %254 = vmatprep.subr.mxu0 0.0
        %255 = vmatpush2.msra.mxu0 0.0
        %256 = vmatprep.subr.mxu0 0.0
        %257 = vmatpush2.msra.mxu0 0.0
        %258 = vmatprep.subr.mxu0 0.0
        %259 = vmatpush2.msra.mxu0 0.0
        %260 = vmatprep.subr.mxu0 0.0
        %261 = vmatpush2.msra.mxu0 0.0
        %262 = vmatprep.subr.mxu0 0.0
        %263 = vmatpush2.msra.mxu0 0.0
        %264 = vmatprep.subr.mxu0 0.0
        %265 = vmatpush2.msra.mxu0 0.0
        %266 = vmatprep.mubr.f32.mxu0 0.0
        %267 = vmatmul.mubr.f32.gmra.mxu0 %v193
        %v268 = vpop.f32.mrf.mxu0
        %v269 = vadd.f32 0.0, %v268
        %v270 = vpop.f32.mrf.mxu0
        %v271 = vadd.f32 0.0, %v270
        %272 = vdwg.mxu0
        %273 = vmatprep.subr.mxu0 0.0
        %274 = vmatpush1.msra.mxu0 0.0
        %275 = vmatprep.subr.mxu0 0.0
        %276 = vmatpush1.msra.mxu0 0.0
        %277 = vmatprep.subr.mxu0 0.0
        %278 = vmatpush1.msra.mxu0 0.0
        %279 = vmatprep.subr.mxu0 0.0
        %280 = vmatpush1.msra.mxu0 0.0
        %281 = vmatprep.subr.mxu0 0.0
        %282 = vmatpush1.msra.mxu0 0.0
        %283 = vmatprep.subr.mxu0 0.0
        %284 = vmatpush1.msra.mxu0 0.0
        %285 = vmatprep.subr.mxu0 0.0
        %286 = vmatpush1.msra.mxu0 0.0
        %287 = vmatprep.subr.mxu0 0.0
        %288 = vmatpush1.msra.mxu0 0.0
        %289 = vmatprep.subr.mxu0 0.0
        %290 = vmatpush1.msra.mxu0 0.0
        %291 = vmatprep.subr.mxu0 0.0
        %292 = vmatpush1.msra.mxu0 0.0
        %293 = vmatprep.subr.mxu0 0.0
        %294 = vmatpush1.msra.mxu0 0.0
        %295 = vmatprep.subr.mxu0 0.0
        %296 = vmatpush1.msra.mxu0 0.0
        %297 = vmatprep.subr.mxu0 0.0
        %298 = vmatpush1.msra.mxu0 0.0
        %299 = vmatprep.subr.mxu0 0.0
        %300 = vmatpush1.msra.mxu0 0.0
        %301 = vmatprep.subr.mxu0 0.0
        %302 = vmatpush1.msra.mxu0 0.0
        %303 = vmatprep.subr.mxu0 0.0
        %304 = vmatpush1.msra.mxu0 %v200
        %305 = vmatprep.subr.mxu0 0.0
        %306 = vmatpush2.msra.mxu0 0.0
        %307 = vmatprep.subr.mxu0 0.0
        %308 = vmatpush2.msra.mxu0 0.0
        %309 = vmatprep.subr.mxu0 0.0
        %310 = vmatpush2.msra.mxu0 0.0
        %311 = vmatprep.subr.mxu0 0.0
        %312 = vmatpush2.msra.mxu0 0.0
        %313 = vmatprep.subr.mxu0 0.0
        %314 = vmatpush2.msra.mxu0 0.0
        %315 = vmatprep.subr.mxu0 0.0
        %316 = vmatpush2.msra.mxu0 0.0
        %317 = vmatprep.subr.mxu0 0.0
        %318 = vmatpush2.msra.mxu0 0.0
        %319 = vmatprep.subr.mxu0 0.0
        %320 = vmatpush2.msra.mxu0 0.0
        %321 = vmatprep.subr.mxu0 0.0
        %322 = vmatpush2.msra.mxu0 0.0
        %323 = vmatprep.subr.mxu0 0.0
        %324 = vmatpush2.msra.mxu0 0.0
        %325 = vmatprep.subr.mxu0 0.0
        %326 = vmatpush2.msra.mxu0 0.0
        %327 = vmatprep.subr.mxu0 0.0
        %328 = vmatpush2.msra.mxu0 0.0
        %329 = vmatprep.subr.mxu0 0.0
        %330 = vmatpush2.msra.mxu0 0.0
        %331 = vmatprep.subr.mxu0 0.0
        %332 = vmatpush2.msra.mxu0 0.0
        %333 = vmatprep.subr.mxu0 0.0
        %334 = vmatpush2.msra.mxu0 0.0
        %335 = vmatprep.subr.mxu0 0.0
        %336 = vmatpush2.msra.mxu0 0.0
        %337 = vmatprep.mubr.f32.mxu0 0.0
        %338 = vmatmul.mubr.f32.gmra.mxu0 %v193
        %v339 = vpop.f32.mrf.mxu0
        %v340 = vadd.f32 0.0, %v339
        %v341 = vpop.f32.mrf.mxu0
        %342 = vdwg.mxu0
        %v344 = vsel %vm191, %v172, 0
        %v346 = vsel %vm195, %v170, 0
        %v348 = vsel %vm195, %v177, 0
        %v350 = vsel %vm195, %v171, 0
        %352 = vmatprep.subr.mxu0 0.0
        %353 = vmatpush1.msra.mxu0 0.0
        %354 = vmatprep.subr.mxu0 0.0
        %355 = vmatpush1.msra.mxu0 0.0
        %356 = vmatprep.subr.mxu0 0.0
        %357 = vmatpush1.msra.mxu0 0.0
        %358 = vmatprep.subr.mxu0 0.0
        %359 = vmatpush1.msra.mxu0 0.0
        %360 = vmatprep.subr.mxu0 0.0
        %361 = vmatpush1.msra.mxu0 0.0
        %362 = vmatprep.subr.mxu0 0.0
        %363 = vmatpush1.msra.mxu0 0.0
        %364 = vmatprep.subr.mxu0 0.0
        %365 = vmatpush1.msra.mxu0 0.0
        %366 = vmatprep.subr.mxu0 0.0
        %367 = vmatpush1.msra.mxu0 0.0
        %368 = vmatprep.subr.mxu0 0.0
        %369 = vmatpush1.msra.mxu0 0.0
        %370 = vmatprep.subr.mxu0 0.0
        %371 = vmatpush1.msra.mxu0 0.0
        %372 = vmatprep.subr.mxu0 0.0
        %373 = vmatpush1.msra.mxu0 0.0
        %374 = vmatprep.subr.mxu0 0.0
        %375 = vmatpush1.msra.mxu0 0.0
        %376 = vmatprep.subr.mxu0 0.0
        %377 = vmatpush1.msra.mxu0 0.0
        %378 = vmatprep.subr.mxu0 0.0
        %379 = vmatpush1.msra.mxu0 0.0
        %380 = vmatprep.subr.mxu0 0.0
        %381 = vmatpush1.msra.mxu0 0.0
        %382 = vmatprep.subr.mxu0 %v348
        %383 = vmatpush1.msra.mxu0 %v346
        %384 = vmatprep.subr.mxu0 0.0
        %385 = vmatpush2.msra.mxu0 0.0
        %386 = vmatprep.subr.mxu0 0.0
        %387 = vmatpush2.msra.mxu0 0.0
        %388 = vmatprep.subr.mxu0 0.0
        %389 = vmatpush2.msra.mxu0 0.0
        %390 = vmatprep.subr.mxu0 0.0
        %391 = vmatpush2.msra.mxu0 0.0
        %392 = vmatprep.subr.mxu0 0.0
        %393 = vmatpush2.msra.mxu0 0.0
        %394 = vmatprep.subr.mxu0 0.0
        %395 = vmatpush2.msra.mxu0 0.0
        %396 = vmatprep.subr.mxu0 0.0
        %397 = vmatpush2.msra.mxu0 0.0
        %398 = vmatprep.subr.mxu0 0.0
        %399 = vmatpush2.msra.mxu0 0.0
        %400 = vmatprep.subr.mxu0 0.0
        %401 = vmatpush2.msra.mxu0 0.0
        %402 = vmatprep.subr.mxu0 0.0
        %403 = vmatpush2.msra.mxu0 0.0
        %404 = vmatprep.subr.mxu0 0.0
        %405 = vmatpush2.msra.mxu0 0.0
        %406 = vmatprep.subr.mxu0 0.0
        %407 = vmatpush2.msra.mxu0 0.0
        %408 = vmatprep.subr.mxu0 0.0
        %409 = vmatpush2.msra.mxu0 0.0
        %410 = vmatprep.subr.mxu0 0.0
        %411 = vmatpush2.msra.mxu0 0.0
        %412 = vmatprep.subr.mxu0 0.0
        %413 = vmatpush2.msra.mxu0 0.0
        %414 = vmatprep.subr.mxu0 0.0
        %415 = vmatpush2.msra.mxu0 0.0
        %416 = vmatprep.mubr.f32.mxu0 0.0
        %417 = vmatmul.mubr.f32.gmra.mxu0 %v344
        %v418 = vpop.f32.mrf.mxu0
        %v419 = vadd.f32 %v269, %v418
        %v420 = vpop.f32.mrf.mxu0
        %v421 = vadd.f32 %v271, %v420
        %422 = vdwg.mxu0
        %423 = vmatprep.subr.mxu0 0.0
        %424 = vmatpush1.msra.mxu0 0.0
        %425 = vmatprep.subr.mxu0 0.0
        %426 = vmatpush1.msra.mxu0 0.0
        %427 = vmatprep.subr.mxu0 0.0
        %428 = vmatpush1.msra.mxu0 0.0
        %429 = vmatprep.subr.mxu0 0.0
        %430 = vmatpush1.msra.mxu0 0.0
        %431 = vmatprep.subr.mxu0 0.0
        %432 = vmatpush1.msra.mxu0 0.0
        %433 = vmatprep.subr.mxu0 0.0
        %434 = vmatpush1.msra.mxu0 0.0
        %435 = vmatprep.subr.mxu0 0.0
        %436 = vmatpush1.msra.mxu0 0.0
        %437 = vmatprep.subr.mxu0 0.0
        %438 = vmatpush1.msra.mxu0 0.0
        %439 = vmatprep.subr.mxu0 0.0
        %440 = vmatpush1.msra.mxu0 0.0
        %441 = vmatprep.subr.mxu0 0.0
        %442 = vmatpush1.msra.mxu0 0.0
        %443 = vmatprep.subr.mxu0 0.0
        %444 = vmatpush1.msra.mxu0 0.0
        %445 = vmatprep.subr.mxu0 0.0
        %446 = vmatpush1.msra.mxu0 0.0
        %447 = vmatprep.subr.mxu0 0.0
        %448 = vmatpush1.msra.mxu0 0.0
        %449 = vmatprep.subr.mxu0 0.0
        %450 = vmatpush1.msra.mxu0 0.0
        %451 = vmatprep.subr.mxu0 0.0
        %452 = vmatpush1.msra.mxu0 0.0
        %453 = vmatprep.subr.mxu0 0.0
        %454 = vmatpush1.msra.mxu0 %v350
        %455 = vmatprep.subr.mxu0 0.0
        %456 = vmatpush2.msra.mxu0 0.0
        %457 = vmatprep.subr.mxu0 0.0
        %458 = vmatpush2.msra.mxu0 0.0
        %459 = vmatprep.subr.mxu0 0.0
        %460 = vmatpush2.msra.mxu0 0.0
        %461 = vmatprep.subr.mxu0 0.0
        %462 = vmatpush2.msra.mxu0 0.0
        %463 = vmatprep.subr.mxu0 0.0
        %464 = vmatpush2.msra.mxu0 0.0
        %465 = vmatprep.subr.mxu0 0.0
        %466 = vmatpush2.msra.mxu0 0.0
        %467 = vmatprep.subr.mxu0 0.0
        %468 = vmatpush2.msra.mxu0 0.0
        %469 = vmatprep.subr.mxu0 0.0
        %470 = vmatpush2.msra.mxu0 0.0
        %471 = vmatprep.subr.mxu0 0.0
        %472 = vmatpush2.msra.mxu0 0.0
        %473 = vmatprep.subr.mxu0 0.0
        %474 = vmatpush2.msra.mxu0 0.0
        %475 = vmatprep.subr.mxu0 0.0
        %476 = vmatpush2.msra.mxu0 0.0
        %477 = vmatprep.subr.mxu0 0.0
        %478 = vmatpush2.msra.mxu0 0.0
        %479 = vmatprep.subr.mxu0 0.0
        %480 = vmatpush2.msra.mxu0 0.0
        %481 = vmatprep.subr.mxu0 0.0
        %482 = vmatpush2.msra.mxu0 0.0
        %483 = vmatprep.subr.mxu0 0.0
        %484 = vmatpush2.msra.mxu0 0.0
        %485 = vmatprep.subr.mxu0 0.0
        %486 = vmatpush2.msra.mxu0 0.0
        %487 = vmatprep.mubr.f32.mxu0 0.0
        %488 = vmatmul.mubr.f32.gmra.mxu0 %v344
        %v489 = vpop.f32.mrf.mxu0
        %v490 = vadd.f32 %v340, %v489
        %v491 = vpop.f32.mrf.mxu0
        %492 = vdwg.mxu0
        %s493 = scalar_lea.vmem %s1, 16
        %v494 = vld [vmem:[%s493] sm:$0xff]
        %495 = vrot.lane.b32.xlu0 %v170, 126
        %v496 = vpop.permute.xlu0 %495
        %497 = vrot.lane.b32.xlu0 %v177, 126
        %v498 = vpop.permute.xlu0 %497
        %499 = vrot.lane.b32.xlu0 %v171, 126
        %v500 = vpop.permute.xlu0 %499
        %501 = vrot.lane.b32.xlu0 %v178, 126
        %v502 = vpop.permute.xlu0 %501
        %vm503 = vcmask 1031168
        %v504 = vsel %vm503, %v496, %v498
        %v505 = vsel %vm503, %v498, %v500
        %v506 = vsel %vm503, %v500, %v502
        %v508 = vsel %vm191, %v494, 0
        %v510 = vsel %vm195, %v504, 0
        %v512 = vsel %vm195, %v505, 0
        %v514 = vsel %vm195, %v506, 0
        %516 = vmatprep.subr.mxu0 0.0
        %517 = vmatpush1.msra.mxu0 0.0
        %518 = vmatprep.subr.mxu0 0.0
        %519 = vmatpush1.msra.mxu0 0.0
        %520 = vmatprep.subr.mxu0 0.0
        %521 = vmatpush1.msra.mxu0 0.0
        %522 = vmatprep.subr.mxu0 0.0
        %523 = vmatpush1.msra.mxu0 0.0
        %524 = vmatprep.subr.mxu0 0.0
        %525 = vmatpush1.msra.mxu0 0.0
        %526 = vmatprep.subr.mxu0 0.0
        %527 = vmatpush1.msra.mxu0 0.0
        %528 = vmatprep.subr.mxu0 0.0
        %529 = vmatpush1.msra.mxu0 0.0
        %530 = vmatprep.subr.mxu0 0.0
        %531 = vmatpush1.msra.mxu0 0.0
        %532 = vmatprep.subr.mxu0 0.0
        %533 = vmatpush1.msra.mxu0 0.0
        %534 = vmatprep.subr.mxu0 0.0
        %535 = vmatpush1.msra.mxu0 0.0
        %536 = vmatprep.subr.mxu0 0.0
        %537 = vmatpush1.msra.mxu0 0.0
        %538 = vmatprep.subr.mxu0 0.0
        %539 = vmatpush1.msra.mxu0 0.0
        %540 = vmatprep.subr.mxu0 0.0
        %541 = vmatpush1.msra.mxu0 0.0
        %542 = vmatprep.subr.mxu0 0.0
        %543 = vmatpush1.msra.mxu0 0.0
        %544 = vmatprep.subr.mxu0 0.0
        %545 = vmatpush1.msra.mxu0 0.0
        %546 = vmatprep.subr.mxu0 %v512
        %547 = vmatpush1.msra.mxu0 %v510
        %548 = vmatprep.subr.mxu0 0.0
        %549 = vmatpush2.msra.mxu0 0.0
        %550 = vmatprep.subr.mxu0 0.0
        %551 = vmatpush2.msra.mxu0 0.0
        %552 = vmatprep.subr.mxu0 0.0
        %553 = vmatpush2.msra.mxu0 0.0
        %554 = vmatprep.subr.mxu0 0.0
        %555 = vmatpush2.msra.mxu0 0.0
        %556 = vmatprep.subr.mxu0 0.0
        %557 = vmatpush2.msra.mxu0 0.0
        %558 = vmatprep.subr.mxu0 0.0
        %559 = vmatpush2.msra.mxu0 0.0
        %560 = vmatprep.subr.mxu0 0.0
        %561 = vmatpush2.msra.mxu0 0.0
        %562 = vmatprep.subr.mxu0 0.0
        %563 = vmatpush2.msra.mxu0 0.0
        %564 = vmatprep.subr.mxu0 0.0
        %565 = vmatpush2.msra.mxu0 0.0
        %566 = vmatprep.subr.mxu0 0.0
        %567 = vmatpush2.msra.mxu0 0.0
        %568 = vmatprep.subr.mxu0 0.0
        %569 = vmatpush2.msra.mxu0 0.0
        %570 = vmatprep.subr.mxu0 0.0
        %571 = vmatpush2.msra.mxu0 0.0
        %572 = vmatprep.subr.mxu0 0.0
        %573 = vmatpush2.msra.mxu0 0.0
        %574 = vmatprep.subr.mxu0 0.0
        %575 = vmatpush2.msra.mxu0 0.0
        %576 = vmatprep.subr.mxu0 0.0
        %577 = vmatpush2.msra.mxu0 0.0
        %578 = vmatprep.subr.mxu0 0.0
        %579 = vmatpush2.msra.mxu0 0.0
        %580 = vmatprep.mubr.f32.mxu0 0.0
        %581 = vmatmul.mubr.f32.gmra.mxu0 %v508
        %v582 = vpop.f32.mrf.mxu0
        %v583 = vadd.f32 0.0, %v582
        %v584 = vpop.f32.mrf.mxu0
        %v585 = vadd.f32 0.0, %v584
        %586 = vdwg.mxu0
        %587 = vmatprep.subr.mxu0 0.0
        %588 = vmatpush1.msra.mxu0 0.0
        %589 = vmatprep.subr.mxu0 0.0
        %590 = vmatpush1.msra.mxu0 0.0
        %591 = vmatprep.subr.mxu0 0.0
        %592 = vmatpush1.msra.mxu0 0.0
        %593 = vmatprep.subr.mxu0 0.0
        %594 = vmatpush1.msra.mxu0 0.0
        %595 = vmatprep.subr.mxu0 0.0
        %596 = vmatpush1.msra.mxu0 0.0
        %597 = vmatprep.subr.mxu0 0.0
        %598 = vmatpush1.msra.mxu0 0.0
        %599 = vmatprep.subr.mxu0 0.0
        %600 = vmatpush1.msra.mxu0 0.0
        %601 = vmatprep.subr.mxu0 0.0
        %602 = vmatpush1.msra.mxu0 0.0
        %603 = vmatprep.subr.mxu0 0.0
        %604 = vmatpush1.msra.mxu0 0.0
        %605 = vmatprep.subr.mxu0 0.0
        %606 = vmatpush1.msra.mxu0 0.0
        %607 = vmatprep.subr.mxu0 0.0
        %608 = vmatpush1.msra.mxu0 0.0
        %609 = vmatprep.subr.mxu0 0.0
        %610 = vmatpush1.msra.mxu0 0.0
        %611 = vmatprep.subr.mxu0 0.0
        %612 = vmatpush1.msra.mxu0 0.0
        %613 = vmatprep.subr.mxu0 0.0
        %614 = vmatpush1.msra.mxu0 0.0
        %615 = vmatprep.subr.mxu0 0.0
        %616 = vmatpush1.msra.mxu0 0.0
        %617 = vmatprep.subr.mxu0 0.0
        %618 = vmatpush1.msra.mxu0 %v514
        %619 = vmatprep.subr.mxu0 0.0
        %620 = vmatpush2.msra.mxu0 0.0
        %621 = vmatprep.subr.mxu0 0.0
        %622 = vmatpush2.msra.mxu0 0.0
        %623 = vmatprep.subr.mxu0 0.0
        %624 = vmatpush2.msra.mxu0 0.0
        %625 = vmatprep.subr.mxu0 0.0
        %626 = vmatpush2.msra.mxu0 0.0
        %627 = vmatprep.subr.mxu0 0.0
        %628 = vmatpush2.msra.mxu0 0.0
        %629 = vmatprep.subr.mxu0 0.0
        %630 = vmatpush2.msra.mxu0 0.0
        %631 = vmatprep.subr.mxu0 0.0
        %632 = vmatpush2.msra.mxu0 0.0
        %633 = vmatprep.subr.mxu0 0.0
        %634 = vmatpush2.msra.mxu0 0.0
        %635 = vmatprep.subr.mxu0 0.0
        %636 = vmatpush2.msra.mxu0 0.0
        %637 = vmatprep.subr.mxu0 0.0
        %638 = vmatpush2.msra.mxu0 0.0
        %639 = vmatprep.subr.mxu0 0.0
        %640 = vmatpush2.msra.mxu0 0.0
        %641 = vmatprep.subr.mxu0 0.0
        %642 = vmatpush2.msra.mxu0 0.0
        %643 = vmatprep.subr.mxu0 0.0
        %644 = vmatpush2.msra.mxu0 0.0
        %645 = vmatprep.subr.mxu0 0.0
        %646 = vmatpush2.msra.mxu0 0.0
        %647 = vmatprep.subr.mxu0 0.0
        %648 = vmatpush2.msra.mxu0 0.0
        %649 = vmatprep.subr.mxu0 0.0
        %650 = vmatpush2.msra.mxu0 0.0
        %651 = vmatprep.mubr.f32.mxu0 0.0
        %652 = vmatmul.mubr.f32.gmra.mxu0 %v508
        %v653 = vpop.f32.mrf.mxu0
        %v654 = vadd.f32 0.0, %v653
        %v655 = vpop.f32.mrf.mxu0
        %656 = vdwg.mxu0
        %v657 = vadd.f32 %v419, %v583
        %v658 = vadd.f32 %v421, %v585
        %v659 = vadd.f32 %v490, %v654
        %s660 = scalar_lea.vmem %s1, 24
        %v661 = vld [vmem:[%s660] sm:$0xff]
        %662 = vrot.lane.b32.xlu0 %v170, 110
        %v663 = vpop.permute.xlu0 %662
        %664 = vrot.lane.b32.xlu0 %v177, 110
        %v665 = vpop.permute.xlu0 %664
        %666 = vrot.lane.b32.xlu0 %v171, 110
        %v667 = vpop.permute.xlu0 %666
        %668 = vrot.lane.b32.xlu0 %v178, 110
        %v669 = vpop.permute.xlu0 %668
        %vm670 = vcmask 900096
        %v671 = vsel %vm670, %v663, %v665
        %v672 = vsel %vm670, %v665, %v667
        %v673 = vsel %vm670, %v667, %v669
        %v675 = vsel %vm191, %v661, 0
        %v677 = vsel %vm195, %v671, 0
        %v679 = vsel %vm195, %v672, 0
        %v681 = vsel %vm195, %v673, 0
        %683 = vmatprep.subr.mxu0 0.0
        %684 = vmatpush1.msra.mxu0 0.0
        %685 = vmatprep.subr.mxu0 0.0
        %686 = vmatpush1.msra.mxu0 0.0
        %687 = vmatprep.subr.mxu0 0.0
        %688 = vmatpush1.msra.mxu0 0.0
        %689 = vmatprep.subr.mxu0 0.0
        %690 = vmatpush1.msra.mxu0 0.0
        %691 = vmatprep.subr.mxu0 0.0
        %692 = vmatpush1.msra.mxu0 0.0
        %693 = vmatprep.subr.mxu0 0.0
        %694 = vmatpush1.msra.mxu0 0.0
        %695 = vmatprep.subr.mxu0 0.0
        %696 = vmatpush1.msra.mxu0 0.0
        %697 = vmatprep.subr.mxu0 0.0
        %698 = vmatpush1.msra.mxu0 0.0
        %699 = vmatprep.subr.mxu0 0.0
        %700 = vmatpush1.msra.mxu0 0.0
        %701 = vmatprep.subr.mxu0 0.0
        %702 = vmatpush1.msra.mxu0 0.0
        %703 = vmatprep.subr.mxu0 0.0
        %704 = vmatpush1.msra.mxu0 0.0
        %705 = vmatprep.subr.mxu0 0.0
        %706 = vmatpush1.msra.mxu0 0.0
        %707 = vmatprep.subr.mxu0 0.0
        %708 = vmatpush1.msra.mxu0 0.0
        %709 = vmatprep.subr.mxu0 0.0
        %710 = vmatpush1.msra.mxu0 0.0
        %711 = vmatprep.subr.mxu0 0.0
        %712 = vmatpush1.msra.mxu0 0.0
        %713 = vmatprep.subr.mxu0 %v679
        %714 = vmatpush1.msra.mxu0 %v677
        %715 = vmatprep.subr.mxu0 0.0
        %716 = vmatpush2.msra.mxu0 0.0
        %717 = vmatprep.subr.mxu0 0.0
        %718 = vmatpush2.msra.mxu0 0.0
        %719 = vmatprep.subr.mxu0 0.0
        %720 = vmatpush2.msra.mxu0 0.0
        %721 = vmatprep.subr.mxu0 0.0
        %722 = vmatpush2.msra.mxu0 0.0
        %723 = vmatprep.subr.mxu0 0.0
        %724 = vmatpush2.msra.mxu0 0.0
        %725 = vmatprep.subr.mxu0 0.0
        %726 = vmatpush2.msra.mxu0 0.0
        %727 = vmatprep.subr.mxu0 0.0
        %728 = vmatpush2.msra.mxu0 0.0
        %729 = vmatprep.subr.mxu0 0.0
        %730 = vmatpush2.msra.mxu0 0.0
        %731 = vmatprep.subr.mxu0 0.0
        %732 = vmatpush2.msra.mxu0 0.0
        %733 = vmatprep.subr.mxu0 0.0
        %734 = vmatpush2.msra.mxu0 0.0
        %735 = vmatprep.subr.mxu0 0.0
        %736 = vmatpush2.msra.mxu0 0.0
        %737 = vmatprep.subr.mxu0 0.0
        %738 = vmatpush2.msra.mxu0 0.0
        %739 = vmatprep.subr.mxu0 0.0
        %740 = vmatpush2.msra.mxu0 0.0
        %741 = vmatprep.subr.mxu0 0.0
        %742 = vmatpush2.msra.mxu0 0.0
        %743 = vmatprep.subr.mxu0 0.0
        %744 = vmatpush2.msra.mxu0 0.0
        %745 = vmatprep.subr.mxu0 0.0
        %746 = vmatpush2.msra.mxu0 0.0
        %747 = vmatprep.mubr.f32.mxu0 0.0
        %748 = vmatmul.mubr.f32.gmra.mxu0 %v675
        %v749 = vpop.f32.mrf.mxu0
        %v750 = vadd.f32 0.0, %v749
        %v751 = vpop.f32.mrf.mxu0
        %v752 = vadd.f32 0.0, %v751
        %753 = vdwg.mxu0
        %754 = vmatprep.subr.mxu0 0.0
        %755 = vmatpush1.msra.mxu0 0.0
        %756 = vmatprep.subr.mxu0 0.0
        %757 = vmatpush1.msra.mxu0 0.0
        %758 = vmatprep.subr.mxu0 0.0
        %759 = vmatpush1.msra.mxu0 0.0
        %760 = vmatprep.subr.mxu0 0.0
        %761 = vmatpush1.msra.mxu0 0.0
        %762 = vmatprep.subr.mxu0 0.0
        %763 = vmatpush1.msra.mxu0 0.0
        %764 = vmatprep.subr.mxu0 0.0
        %765 = vmatpush1.msra.mxu0 0.0
        %766 = vmatprep.subr.mxu0 0.0
        %767 = vmatpush1.msra.mxu0 0.0
        %768 = vmatprep.subr.mxu0 0.0
        %769 = vmatpush1.msra.mxu0 0.0
        %770 = vmatprep.subr.mxu0 0.0
        %771 = vmatpush1.msra.mxu0 0.0
        %772 = vmatprep.subr.mxu0 0.0
        %773 = vmatpush1.msra.mxu0 0.0
        %774 = vmatprep.subr.mxu0 0.0
        %775 = vmatpush1.msra.mxu0 0.0
        %776 = vmatprep.subr.mxu0 0.0
        %777 = vmatpush1.msra.mxu0 0.0
        %778 = vmatprep.subr.mxu0 0.0
        %779 = vmatpush1.msra.mxu0 0.0
        %780 = vmatprep.subr.mxu0 0.0
        %781 = vmatpush1.msra.mxu0 0.0
        %782 = vmatprep.subr.mxu0 0.0
        %783 = vmatpush1.msra.mxu0 0.0
        %784 = vmatprep.subr.mxu0 0.0
        %785 = vmatpush1.msra.mxu0 %v681
        %786 = vmatprep.subr.mxu0 0.0
        %787 = vmatpush2.msra.mxu0 0.0
        %788 = vmatprep.subr.mxu0 0.0
        %789 = vmatpush2.msra.mxu0 0.0
        %790 = vmatprep.subr.mxu0 0.0
        %791 = vmatpush2.msra.mxu0 0.0
        %792 = vmatprep.subr.mxu0 0.0
        %793 = vmatpush2.msra.mxu0 0.0
        %794 = vmatprep.subr.mxu0 0.0
        %795 = vmatpush2.msra.mxu0 0.0
        %796 = vmatprep.subr.mxu0 0.0
        %797 = vmatpush2.msra.mxu0 0.0
        %798 = vmatprep.subr.mxu0 0.0
        %799 = vmatpush2.msra.mxu0 0.0
        %800 = vmatprep.subr.mxu0 0.0
        %801 = vmatpush2.msra.mxu0 0.0
        %802 = vmatprep.subr.mxu0 0.0
        %803 = vmatpush2.msra.mxu0 0.0
        %804 = vmatprep.subr.mxu0 0.0
        %805 = vmatpush2.msra.mxu0 0.0
        %806 = vmatprep.subr.mxu0 0.0
        %807 = vmatpush2.msra.mxu0 0.0
        %808 = vmatprep.subr.mxu0 0.0
        %809 = vmatpush2.msra.mxu0 0.0
        %810 = vmatprep.subr.mxu0 0.0
        %811 = vmatpush2.msra.mxu0 0.0
        %812 = vmatprep.subr.mxu0 0.0
        %813 = vmatpush2.msra.mxu0 0.0
        %814 = vmatprep.subr.mxu0 0.0
        %815 = vmatpush2.msra.mxu0 0.0
        %816 = vmatprep.subr.mxu0 0.0
        %817 = vmatpush2.msra.mxu0 0.0
        %818 = vmatprep.mubr.f32.mxu0 0.0
        %819 = vmatmul.mubr.f32.gmra.mxu0 %v675
        %v820 = vpop.f32.mrf.mxu0
        %v821 = vadd.f32 0.0, %v820
        %v822 = vpop.f32.mrf.mxu0
        %823 = vdwg.mxu0
        %v824 = vadd.f32 %v657, %v750
        %v825 = vadd.f32 %v658, %v752
        %v826 = vadd.f32 %v659, %v821
        %s827 = scalar_lea.vmem %s1, 32
        %v828 = vld [vmem:[%s827] sm:$0xff]
        %829 = vrot.lane.b32.xlu0 %v170, 109
        %v830 = vpop.permute.xlu0 %829
        %831 = vrot.lane.b32.xlu0 %v177, 109
        %v832 = vpop.permute.xlu0 %831
        %833 = vrot.lane.b32.xlu0 %v171, 109
        %v834 = vpop.permute.xlu0 %833
        %835 = vrot.lane.b32.xlu0 %v178, 109
        %v836 = vpop.permute.xlu0 %835
        %vm837 = vcmask 891904
        %v838 = vsel %vm837, %v830, %v832
        %v839 = vsel %vm837, %v832, %v834
        %v840 = vsel %vm837, %v834, %v836
        %v842 = vsel %vm191, %v828, 0
        %v844 = vsel %vm195, %v838, 0
        %v846 = vsel %vm195, %v839, 0
        %v848 = vsel %vm195, %v840, 0
        %850 = vmatprep.subr.mxu0 0.0
        %851 = vmatpush1.msra.mxu0 0.0
        %852 = vmatprep.subr.mxu0 0.0
        %853 = vmatpush1.msra.mxu0 0.0
        %854 = vmatprep.subr.mxu0 0.0
        %855 = vmatpush1.msra.mxu0 0.0
        %856 = vmatprep.subr.mxu0 0.0
        %857 = vmatpush1.msra.mxu0 0.0
        %858 = vmatprep.subr.mxu0 0.0
        %859 = vmatpush1.msra.mxu0 0.0
        %860 = vmatprep.subr.mxu0 0.0
        %861 = vmatpush1.msra.mxu0 0.0
        %862 = vmatprep.subr.mxu0 0.0
        %863 = vmatpush1.msra.mxu0 0.0
        %864 = vmatprep.subr.mxu0 0.0
        %865 = vmatpush1.msra.mxu0 0.0
        %866 = vmatprep.subr.mxu0 0.0
        %867 = vmatpush1.msra.mxu0 0.0
        %868 = vmatprep.subr.mxu0 0.0
        %869 = vmatpush1.msra.mxu0 0.0
        %870 = vmatprep.subr.mxu0 0.0
        %871 = vmatpush1.msra.mxu0 0.0
        %872 = vmatprep.subr.mxu0 0.0
        %873 = vmatpush1.msra.mxu0 0.0
        %874 = vmatprep.subr.mxu0 0.0
        %875 = vmatpush1.msra.mxu0 0.0
        %876 = vmatprep.subr.mxu0 0.0
        %877 = vmatpush1.msra.mxu0 0.0
        %878 = vmatprep.subr.mxu0 0.0
        %879 = vmatpush1.msra.mxu0 0.0
        %880 = vmatprep.subr.mxu0 %v846
        %881 = vmatpush1.msra.mxu0 %v844
        %882 = vmatprep.subr.mxu0 0.0
        %883 = vmatpush2.msra.mxu0 0.0
        %884 = vmatprep.subr.mxu0 0.0
        %885 = vmatpush2.msra.mxu0 0.0
        %886 = vmatprep.subr.mxu0 0.0
        %887 = vmatpush2.msra.mxu0 0.0
        %888 = vmatprep.subr.mxu0 0.0
        %889 = vmatpush2.msra.mxu0 0.0
        %890 = vmatprep.subr.mxu0 0.0
        %891 = vmatpush2.msra.mxu0 0.0
        %892 = vmatprep.subr.mxu0 0.0
        %893 = vmatpush2.msra.mxu0 0.0
        %894 = vmatprep.subr.mxu0 0.0
        %895 = vmatpush2.msra.mxu0 0.0
        %896 = vmatprep.subr.mxu0 0.0
        %897 = vmatpush2.msra.mxu0 0.0
        %898 = vmatprep.subr.mxu0 0.0
        %899 = vmatpush2.msra.mxu0 0.0
        %900 = vmatprep.subr.mxu0 0.0
        %901 = vmatpush2.msra.mxu0 0.0
        %902 = vmatprep.subr.mxu0 0.0
        %903 = vmatpush2.msra.mxu0 0.0
        %904 = vmatprep.subr.mxu0 0.0
        %905 = vmatpush2.msra.mxu0 0.0
        %906 = vmatprep.subr.mxu0 0.0
        %907 = vmatpush2.msra.mxu0 0.0
        %908 = vmatprep.subr.mxu0 0.0
        %909 = vmatpush2.msra.mxu0 0.0
        %910 = vmatprep.subr.mxu0 0.0
        %911 = vmatpush2.msra.mxu0 0.0
        %912 = vmatprep.subr.mxu0 0.0
        %913 = vmatpush2.msra.mxu0 0.0
        %914 = vmatprep.mubr.f32.mxu0 0.0
        %915 = vmatmul.mubr.f32.gmra.mxu0 %v842
        %v916 = vpop.f32.mrf.mxu0
        %v917 = vadd.f32 0.0, %v916
        %v918 = vpop.f32.mrf.mxu0
        %v919 = vadd.f32 0.0, %v918
        %920 = vdwg.mxu0
        %921 = vmatprep.subr.mxu0 0.0
        %922 = vmatpush1.msra.mxu0 0.0
        %923 = vmatprep.subr.mxu0 0.0
        %924 = vmatpush1.msra.mxu0 0.0
        %925 = vmatprep.subr.mxu0 0.0
        %926 = vmatpush1.msra.mxu0 0.0
        %927 = vmatprep.subr.mxu0 0.0
        %928 = vmatpush1.msra.mxu0 0.0
        %929 = vmatprep.subr.mxu0 0.0
        %930 = vmatpush1.msra.mxu0 0.0
        %931 = vmatprep.subr.mxu0 0.0
        %932 = vmatpush1.msra.mxu0 0.0
        %933 = vmatprep.subr.mxu0 0.0
        %934 = vmatpush1.msra.mxu0 0.0
        %935 = vmatprep.subr.mxu0 0.0
        %936 = vmatpush1.msra.mxu0 0.0
        %937 = vmatprep.subr.mxu0 0.0
        %938 = vmatpush1.msra.mxu0 0.0
        %939 = vmatprep.subr.mxu0 0.0
        %940 = vmatpush1.msra.mxu0 0.0
        %941 = vmatprep.subr.mxu0 0.0
        %942 = vmatpush1.msra.mxu0 0.0
        %943 = vmatprep.subr.mxu0 0.0
        %944 = vmatpush1.msra.mxu0 0.0
        %945 = vmatprep.subr.mxu0 0.0
        %946 = vmatpush1.msra.mxu0 0.0
        %947 = vmatprep.subr.mxu0 0.0
        %948 = vmatpush1.msra.mxu0 0.0
        %949 = vmatprep.subr.mxu0 0.0
        %950 = vmatpush1.msra.mxu0 0.0
        %951 = vmatprep.subr.mxu0 0.0
        %952 = vmatpush1.msra.mxu0 %v848
        %953 = vmatprep.subr.mxu0 0.0
        %954 = vmatpush2.msra.mxu0 0.0
        %955 = vmatprep.subr.mxu0 0.0
        %956 = vmatpush2.msra.mxu0 0.0
        %957 = vmatprep.subr.mxu0 0.0
        %958 = vmatpush2.msra.mxu0 0.0
        %959 = vmatprep.subr.mxu0 0.0
        %960 = vmatpush2.msra.mxu0 0.0
        %961 = vmatprep.subr.mxu0 0.0
        %962 = vmatpush2.msra.mxu0 0.0
        %963 = vmatprep.subr.mxu0 0.0
        %964 = vmatpush2.msra.mxu0 0.0
        %965 = vmatprep.subr.mxu0 0.0
        %966 = vmatpush2.msra.mxu0 0.0
        %967 = vmatprep.subr.mxu0 0.0
        %968 = vmatpush2.msra.mxu0 0.0
        %969 = vmatprep.subr.mxu0 0.0
        %970 = vmatpush2.msra.mxu0 0.0
        %971 = vmatprep.subr.mxu0 0.0
        %972 = vmatpush2.msra.mxu0 0.0
        %973 = vmatprep.subr.mxu0 0.0
        %974 = vmatpush2.msra.mxu0 0.0
        %975 = vmatprep.subr.mxu0 0.0
        %976 = vmatpush2.msra.mxu0 0.0
        %977 = vmatprep.subr.mxu0 0.0
        %978 = vmatpush2.msra.mxu0 0.0
        %979 = vmatprep.subr.mxu0 0.0
        %980 = vmatpush2.msra.mxu0 0.0
        %981 = vmatprep.subr.mxu0 0.0
        %982 = vmatpush2.msra.mxu0 0.0
        %983 = vmatprep.subr.mxu0 0.0
        %984 = vmatpush2.msra.mxu0 0.0
        %985 = vmatprep.mubr.f32.mxu0 0.0
        %986 = vmatmul.mubr.f32.gmra.mxu0 %v842
        %v987 = vpop.f32.mrf.mxu0
        %v988 = vadd.f32 0.0, %v987
        %v989 = vpop.f32.mrf.mxu0
        %990 = vdwg.mxu0
        %v991 = vadd.f32 %v824, %v917
        %v992 = vadd.f32 %v825, %v919
        %v993 = vadd.f32 %v826, %v988
        %s994 = scalar_lea.vmem %s1, 40
        %v995 = vld [vmem:[%s994] sm:$0xff]
        %996 = vrot.lane.b32.xlu0 %v170, 108
        %v997 = vpop.permute.xlu0 %996
        %998 = vrot.lane.b32.xlu0 %v177, 108
        %v999 = vpop.permute.xlu0 %998
        %1000 = vrot.lane.b32.xlu0 %v171, 108
        %v1001 = vpop.permute.xlu0 %1000
        %1002 = vrot.lane.b32.xlu0 %v178, 108
        %v1003 = vpop.permute.xlu0 %1002
        %vm1004 = vcmask 883712
        %v1005 = vsel %vm1004, %v997, %v999
        %v1006 = vsel %vm1004, %v999, %v1001
        %v1007 = vsel %vm1004, %v1001, %v1003
        %v1009 = vsel %vm191, %v995, 0
        %v1011 = vsel %vm195, %v1005, 0
        %v1013 = vsel %vm195, %v1006, 0
        %v1015 = vsel %vm195, %v1007, 0
        %1017 = vmatprep.subr.mxu0 0.0
        %1018 = vmatpush1.msra.mxu0 0.0
        %1019 = vmatprep.subr.mxu0 0.0
        %1020 = vmatpush1.msra.mxu0 0.0
        %1021 = vmatprep.subr.mxu0 0.0
        %1022 = vmatpush1.msra.mxu0 0.0
        %1023 = vmatprep.subr.mxu0 0.0
        %1024 = vmatpush1.msra.mxu0 0.0
        %1025 = vmatprep.subr.mxu0 0.0
        %1026 = vmatpush1.msra.mxu0 0.0
        %1027 = vmatprep.subr.mxu0 0.0
        %1028 = vmatpush1.msra.mxu0 0.0
        %1029 = vmatprep.subr.mxu0 0.0
        %1030 = vmatpush1.msra.mxu0 0.0
        %1031 = vmatprep.subr.mxu0 0.0
        %1032 = vmatpush1.msra.mxu0 0.0
        %1033 = vmatprep.subr.mxu0 0.0
        %1034 = vmatpush1.msra.mxu0 0.0
        %1035 = vmatprep.subr.mxu0 0.0
        %1036 = vmatpush1.msra.mxu0 0.0
        %1037 = vmatprep.subr.mxu0 0.0
        %1038 = vmatpush1.msra.mxu0 0.0
        %1039 = vmatprep.subr.mxu0 0.0
        %1040 = vmatpush1.msra.mxu0 0.0
        %1041 = vmatprep.subr.mxu0 0.0
        %1042 = vmatpush1.msra.mxu0 0.0
        %1043 = vmatprep.subr.mxu0 0.0
        %1044 = vmatpush1.msra.mxu0 0.0
        %1045 = vmatprep.subr.mxu0 0.0
        %1046 = vmatpush1.msra.mxu0 0.0
        %1047 = vmatprep.subr.mxu0 %v1013
        %1048 = vmatpush1.msra.mxu0 %v1011
        %1049 = vmatprep.subr.mxu0 0.0
        %1050 = vmatpush2.msra.mxu0 0.0
        %1051 = vmatprep.subr.mxu0 0.0
        %1052 = vmatpush2.msra.mxu0 0.0
        %1053 = vmatprep.subr.mxu0 0.0
        %1054 = vmatpush2.msra.mxu0 0.0
        %1055 = vmatprep.subr.mxu0 0.0
        %1056 = vmatpush2.msra.mxu0 0.0
        %1057 = vmatprep.subr.mxu0 0.0
        %1058 = vmatpush2.msra.mxu0 0.0
        %1059 = vmatprep.subr.mxu0 0.0
        %1060 = vmatpush2.msra.mxu0 0.0
        %1061 = vmatprep.subr.mxu0 0.0
        %1062 = vmatpush2.msra.mxu0 0.0
        %1063 = vmatprep.subr.mxu0 0.0
        %1064 = vmatpush2.msra.mxu0 0.0
        %1065 = vmatprep.subr.mxu0 0.0
        %1066 = vmatpush2.msra.mxu0 0.0
        %1067 = vmatprep.subr.mxu0 0.0
        %1068 = vmatpush2.msra.mxu0 0.0
        %1069 = vmatprep.subr.mxu0 0.0
        %1070 = vmatpush2.msra.mxu0 0.0
        %1071 = vmatprep.subr.mxu0 0.0
        %1072 = vmatpush2.msra.mxu0 0.0
        %1073 = vmatprep.subr.mxu0 0.0
        %1074 = vmatpush2.msra.mxu0 0.0
        %1075 = vmatprep.subr.mxu0 0.0
        %1076 = vmatpush2.msra.mxu0 0.0
        %1077 = vmatprep.subr.mxu0 0.0
        %1078 = vmatpush2.msra.mxu0 0.0
        %1079 = vmatprep.subr.mxu0 0.0
        %1080 = vmatpush2.msra.mxu0 0.0
        %1081 = vmatprep.mubr.f32.mxu0 0.0
        %1082 = vmatmul.mubr.f32.gmra.mxu0 %v1009
        %v1083 = vpop.f32.mrf.mxu0
        %v1084 = vadd.f32 0.0, %v1083
        %v1085 = vpop.f32.mrf.mxu0
        %v1086 = vadd.f32 0.0, %v1085
        %1087 = vdwg.mxu0
        %1088 = vmatprep.subr.mxu0 0.0
        %1089 = vmatpush1.msra.mxu0 0.0
        %1090 = vmatprep.subr.mxu0 0.0
        %1091 = vmatpush1.msra.mxu0 0.0
        %1092 = vmatprep.subr.mxu0 0.0
        %1093 = vmatpush1.msra.mxu0 0.0
        %1094 = vmatprep.subr.mxu0 0.0
        %1095 = vmatpush1.msra.mxu0 0.0
        %1096 = vmatprep.subr.mxu0 0.0
        %1097 = vmatpush1.msra.mxu0 0.0
        %1098 = vmatprep.subr.mxu0 0.0
        %1099 = vmatpush1.msra.mxu0 0.0
        %1100 = vmatprep.subr.mxu0 0.0
        %1101 = vmatpush1.msra.mxu0 0.0
        %1102 = vmatprep.subr.mxu0 0.0
        %1103 = vmatpush1.msra.mxu0 0.0
        %1104 = vmatprep.subr.mxu0 0.0
        %1105 = vmatpush1.msra.mxu0 0.0
        %1106 = vmatprep.subr.mxu0 0.0
        %1107 = vmatpush1.msra.mxu0 0.0
        %1108 = vmatprep.subr.mxu0 0.0
        %1109 = vmatpush1.msra.mxu0 0.0
        %1110 = vmatprep.subr.mxu0 0.0
        %1111 = vmatpush1.msra.mxu0 0.0
        %1112 = vmatprep.subr.mxu0 0.0
        %1113 = vmatpush1.msra.mxu0 0.0
        %1114 = vmatprep.subr.mxu0 0.0
        %1115 = vmatpush1.msra.mxu0 0.0
        %1116 = vmatprep.subr.mxu0 0.0
        %1117 = vmatpush1.msra.mxu0 0.0
        %1118 = vmatprep.subr.mxu0 0.0
        %1119 = vmatpush1.msra.mxu0 %v1015
        %1120 = vmatprep.subr.mxu0 0.0
        %1121 = vmatpush2.msra.mxu0 0.0
        %1122 = vmatprep.subr.mxu0 0.0
        %1123 = vmatpush2.msra.mxu0 0.0
        %1124 = vmatprep.subr.mxu0 0.0
        %1125 = vmatpush2.msra.mxu0 0.0
        %1126 = vmatprep.subr.mxu0 0.0
        %1127 = vmatpush2.msra.mxu0 0.0
        %1128 = vmatprep.subr.mxu0 0.0
        %1129 = vmatpush2.msra.mxu0 0.0
        %1130 = vmatprep.subr.mxu0 0.0
        %1131 = vmatpush2.msra.mxu0 0.0
        %1132 = vmatprep.subr.mxu0 0.0
        %1133 = vmatpush2.msra.mxu0 0.0
        %1134 = vmatprep.subr.mxu0 0.0
        %1135 = vmatpush2.msra.mxu0 0.0
        %1136 = vmatprep.subr.mxu0 0.0
        %1137 = vmatpush2.msra.mxu0 0.0
        %1138 = vmatprep.subr.mxu0 0.0
        %1139 = vmatpush2.msra.mxu0 0.0
        %1140 = vmatprep.subr.mxu0 0.0
        %1141 = vmatpush2.msra.mxu0 0.0
        %1142 = vmatprep.subr.mxu0 0.0
        %1143 = vmatpush2.msra.mxu0 0.0
        %1144 = vmatprep.subr.mxu0 0.0
        %1145 = vmatpush2.msra.mxu0 0.0
        %1146 = vmatprep.subr.mxu0 0.0
        %1147 = vmatpush2.msra.mxu0 0.0
        %1148 = vmatprep.subr.mxu0 0.0
        %1149 = vmatpush2.msra.mxu0 0.0
        %1150 = vmatprep.subr.mxu0 0.0
        %1151 = vmatpush2.msra.mxu0 0.0
        %1152 = vmatprep.mubr.f32.mxu0 0.0
        %1153 = vmatmul.mubr.f32.gmra.mxu0 %v1009
        %v1154 = vpop.f32.mrf.mxu0
        %v1155 = vadd.f32 0.0, %v1154
        %v1156 = vpop.f32.mrf.mxu0
        %1157 = vdwg.mxu0
        %v1158 = vadd.f32 %v991, %v1084
        %v1159 = vadd.f32 %v992, %v1086
        %v1160 = vadd.f32 %v993, %v1155
        %s1161 = scalar_lea.vmem %s1, 48
        %v1162 = vld [vmem:[%s1161] sm:$0xff]
        %1163 = vrot.lane.b32.xlu0 %v170, 92
        %v1164 = vpop.permute.xlu0 %1163
        %1165 = vrot.lane.b32.xlu0 %v177, 92
        %v1166 = vpop.permute.xlu0 %1165
        %1167 = vrot.lane.b32.xlu0 %v171, 92
        %v1168 = vpop.permute.xlu0 %1167
        %1169 = vrot.lane.b32.xlu0 %v178, 92
        %v1170 = vpop.permute.xlu0 %1169
        %vm1171 = vcmask 752640
        %v1172 = vsel %vm1171, %v1164, %v1166
        %v1173 = vsel %vm1171, %v1166, %v1168
        %v1174 = vsel %vm1171, %v1168, %v1170
        %v1176 = vsel %vm191, %v1162, 0
        %v1178 = vsel %vm195, %v1172, 0
        %v1180 = vsel %vm195, %v1173, 0
        %v1182 = vsel %vm195, %v1174, 0
        %1184 = vmatprep.subr.mxu0 0.0
        %1185 = vmatpush1.msra.mxu0 0.0
        %1186 = vmatprep.subr.mxu0 0.0
        %1187 = vmatpush1.msra.mxu0 0.0
        %1188 = vmatprep.subr.mxu0 0.0
        %1189 = vmatpush1.msra.mxu0 0.0
        %1190 = vmatprep.subr.mxu0 0.0
        %1191 = vmatpush1.msra.mxu0 0.0
        %1192 = vmatprep.subr.mxu0 0.0
        %1193 = vmatpush1.msra.mxu0 0.0
        %1194 = vmatprep.subr.mxu0 0.0
        %1195 = vmatpush1.msra.mxu0 0.0
        %1196 = vmatprep.subr.mxu0 0.0
        %1197 = vmatpush1.msra.mxu0 0.0
        %1198 = vmatprep.subr.mxu0 0.0
        %1199 = vmatpush1.msra.mxu0 0.0
        %1200 = vmatprep.subr.mxu0 0.0
        %1201 = vmatpush1.msra.mxu0 0.0
        %1202 = vmatprep.subr.mxu0 0.0
        %1203 = vmatpush1.msra.mxu0 0.0
        %1204 = vmatprep.subr.mxu0 0.0
        %1205 = vmatpush1.msra.mxu0 0.0
        %1206 = vmatprep.subr.mxu0 0.0
        %1207 = vmatpush1.msra.mxu0 0.0
        %1208 = vmatprep.subr.mxu0 0.0
        %1209 = vmatpush1.msra.mxu0 0.0
        %1210 = vmatprep.subr.mxu0 0.0
        %1211 = vmatpush1.msra.mxu0 0.0
        %1212 = vmatprep.subr.mxu0 0.0
        %1213 = vmatpush1.msra.mxu0 0.0
        %1214 = vmatprep.subr.mxu0 %v1180
        %1215 = vmatpush1.msra.mxu0 %v1178
        %1216 = vmatprep.subr.mxu0 0.0
        %1217 = vmatpush2.msra.mxu0 0.0
        %1218 = vmatprep.subr.mxu0 0.0
        %1219 = vmatpush2.msra.mxu0 0.0
        %1220 = vmatprep.subr.mxu0 0.0
        %1221 = vmatpush2.msra.mxu0 0.0
        %1222 = vmatprep.subr.mxu0 0.0
        %1223 = vmatpush2.msra.mxu0 0.0
        %1224 = vmatprep.subr.mxu0 0.0
        %1225 = vmatpush2.msra.mxu0 0.0
        %1226 = vmatprep.subr.mxu0 0.0
        %1227 = vmatpush2.msra.mxu0 0.0
        %1228 = vmatprep.subr.mxu0 0.0
        %1229 = vmatpush2.msra.mxu0 0.0
        %1230 = vmatprep.subr.mxu0 0.0
        %1231 = vmatpush2.msra.mxu0 0.0
        %1232 = vmatprep.subr.mxu0 0.0
        %1233 = vmatpush2.msra.mxu0 0.0
        %1234 = vmatprep.subr.mxu0 0.0
        %1235 = vmatpush2.msra.mxu0 0.0
        %1236 = vmatprep.subr.mxu0 0.0
        %1237 = vmatpush2.msra.mxu0 0.0
        %1238 = vmatprep.subr.mxu0 0.0
        %1239 = vmatpush2.msra.mxu0 0.0
        %1240 = vmatprep.subr.mxu0 0.0
        %1241 = vmatpush2.msra.mxu0 0.0
        %1242 = vmatprep.subr.mxu0 0.0
        %1243 = vmatpush2.msra.mxu0 0.0
        %1244 = vmatprep.subr.mxu0 0.0
        %1245 = vmatpush2.msra.mxu0 0.0
        %1246 = vmatprep.subr.mxu0 0.0
        %1247 = vmatpush2.msra.mxu0 0.0
        %1248 = vmatprep.mubr.f32.mxu0 0.0
        %1249 = vmatmul.mubr.f32.gmra.mxu0 %v1176
        %v1250 = vpop.f32.mrf.mxu0
        %v1251 = vadd.f32 0.0, %v1250
        %v1252 = vpop.f32.mrf.mxu0
        %v1253 = vadd.f32 0.0, %v1252
        %1254 = vdwg.mxu0
        %1255 = vmatprep.subr.mxu0 0.0
        %1256 = vmatpush1.msra.mxu0 0.0
        %1257 = vmatprep.subr.mxu0 0.0
        %1258 = vmatpush1.msra.mxu0 0.0
        %1259 = vmatprep.subr.mxu0 0.0
        %1260 = vmatpush1.msra.mxu0 0.0
        %1261 = vmatprep.subr.mxu0 0.0
        %1262 = vmatpush1.msra.mxu0 0.0
        %1263 = vmatprep.subr.mxu0 0.0
        %1264 = vmatpush1.msra.mxu0 0.0
        %1265 = vmatprep.subr.mxu0 0.0
        %1266 = vmatpush1.msra.mxu0 0.0
        %1267 = vmatprep.subr.mxu0 0.0
        %1268 = vmatpush1.msra.mxu0 0.0
        %1269 = vmatprep.subr.mxu0 0.0
        %1270 = vmatpush1.msra.mxu0 0.0
        %1271 = vmatprep.subr.mxu0 0.0
        %1272 = vmatpush1.msra.mxu0 0.0
        %1273 = vmatprep.subr.mxu0 0.0
        %1274 = vmatpush1.msra.mxu0 0.0
        %1275 = vmatprep.subr.mxu0 0.0
        %1276 = vmatpush1.msra.mxu0 0.0
        %1277 = vmatprep.subr.mxu0 0.0
        %1278 = vmatpush1.msra.mxu0 0.0
        %1279 = vmatprep.subr.mxu0 0.0
        %1280 = vmatpush1.msra.mxu0 0.0
        %1281 = vmatprep.subr.mxu0 0.0
        %1282 = vmatpush1.msra.mxu0 0.0
        %1283 = vmatprep.subr.mxu0 0.0
        %1284 = vmatpush1.msra.mxu0 0.0
        %1285 = vmatprep.subr.mxu0 0.0
        %1286 = vmatpush1.msra.mxu0 %v1182
        %1287 = vmatprep.subr.mxu0 0.0
        %1288 = vmatpush2.msra.mxu0 0.0
        %1289 = vmatprep.subr.mxu0 0.0
        %1290 = vmatpush2.msra.mxu0 0.0
        %1291 = vmatprep.subr.mxu0 0.0
        %1292 = vmatpush2.msra.mxu0 0.0
        %1293 = vmatprep.subr.mxu0 0.0
        %1294 = vmatpush2.msra.mxu0 0.0
        %1295 = vmatprep.subr.mxu0 0.0
        %1296 = vmatpush2.msra.mxu0 0.0
        %1297 = vmatprep.subr.mxu0 0.0
        %1298 = vmatpush2.msra.mxu0 0.0
        %1299 = vmatprep.subr.mxu0 0.0
        %1300 = vmatpush2.msra.mxu0 0.0
        %1301 = vmatprep.subr.mxu0 0.0
        %1302 = vmatpush2.msra.mxu0 0.0
        %1303 = vmatprep.subr.mxu0 0.0
        %1304 = vmatpush2.msra.mxu0 0.0
        %1305 = vmatprep.subr.mxu0 0.0
        %1306 = vmatpush2.msra.mxu0 0.0
        %1307 = vmatprep.subr.mxu0 0.0
        %1308 = vmatpush2.msra.mxu0 0.0
        %1309 = vmatprep.subr.mxu0 0.0
        %1310 = vmatpush2.msra.mxu0 0.0
        %1311 = vmatprep.subr.mxu0 0.0
        %1312 = vmatpush2.msra.mxu0 0.0
        %1313 = vmatprep.subr.mxu0 0.0
        %1314 = vmatpush2.msra.mxu0 0.0
        %1315 = vmatprep.subr.mxu0 0.0
        %1316 = vmatpush2.msra.mxu0 0.0
        %1317 = vmatprep.subr.mxu0 0.0
        %1318 = vmatpush2.msra.mxu0 0.0
        %1319 = vmatprep.mubr.f32.mxu0 0.0
        %1320 = vmatmul.mubr.f32.gmra.mxu0 %v1176
        %v1321 = vpop.f32.mrf.mxu0
        %v1322 = vadd.f32 0.0, %v1321
        %v1323 = vpop.f32.mrf.mxu0
        %1324 = vdwg.mxu0
        %v1325 = vadd.f32 %v1158, %v1251
        %v1326 = vadd.f32 %v1159, %v1253
        %v1327 = vadd.f32 %v1160, %v1322
        %s1328 = scalar_lea.vmem %s1, 56
        %v1329 = vld [vmem:[%s1328] sm:$0xff]
        %1330 = vrot.lane.b32.xlu0 %v170, 91
        %v1331 = vpop.permute.xlu0 %1330
        %1332 = vrot.lane.b32.xlu0 %v177, 91
        %v1333 = vpop.permute.xlu0 %1332
        %1334 = vrot.lane.b32.xlu0 %v171, 91
        %v1335 = vpop.permute.xlu0 %1334
        %1336 = vrot.lane.b32.xlu0 %v178, 91
        %v1337 = vpop.permute.xlu0 %1336
        %vm1338 = vcmask 744448
        %v1339 = vsel %vm1338, %v1331, %v1333
        %v1340 = vsel %vm1338, %v1333, %v1335
        %v1341 = vsel %vm1338, %v1335, %v1337
        %v1343 = vsel %vm191, %v1329, 0
        %v1345 = vsel %vm195, %v1339, 0
        %v1347 = vsel %vm195, %v1340, 0
        %v1349 = vsel %vm195, %v1341, 0
        %1351 = vmatprep.subr.mxu0 0.0
        %1352 = vmatpush1.msra.mxu0 0.0
        %1353 = vmatprep.subr.mxu0 0.0
        %1354 = vmatpush1.msra.mxu0 0.0
        %1355 = vmatprep.subr.mxu0 0.0
        %1356 = vmatpush1.msra.mxu0 0.0
        %1357 = vmatprep.subr.mxu0 0.0
        %1358 = vmatpush1.msra.mxu0 0.0
        %1359 = vmatprep.subr.mxu0 0.0
        %1360 = vmatpush1.msra.mxu0 0.0
        %1361 = vmatprep.subr.mxu0 0.0
        %1362 = vmatpush1.msra.mxu0 0.0
        %1363 = vmatprep.subr.mxu0 0.0
        %1364 = vmatpush1.msra.mxu0 0.0
        %1365 = vmatprep.subr.mxu0 0.0
        %1366 = vmatpush1.msra.mxu0 0.0
        %1367 = vmatprep.subr.mxu0 0.0
        %1368 = vmatpush1.msra.mxu0 0.0
        %1369 = vmatprep.subr.mxu0 0.0
        %1370 = vmatpush1.msra.mxu0 0.0
        %1371 = vmatprep.subr.mxu0 0.0
        %1372 = vmatpush1.msra.mxu0 0.0
        %1373 = vmatprep.subr.mxu0 0.0
        %1374 = vmatpush1.msra.mxu0 0.0
        %1375 = vmatprep.subr.mxu0 0.0
        %1376 = vmatpush1.msra.mxu0 0.0
        %1377 = vmatprep.subr.mxu0 0.0
        %1378 = vmatpush1.msra.mxu0 0.0
        %1379 = vmatprep.subr.mxu0 0.0
        %1380 = vmatpush1.msra.mxu0 0.0
        %1381 = vmatprep.subr.mxu0 %v1347
        %1382 = vmatpush1.msra.mxu0 %v1345
        %1383 = vmatprep.subr.mxu0 0.0
        %1384 = vmatpush2.msra.mxu0 0.0
        %1385 = vmatprep.subr.mxu0 0.0
        %1386 = vmatpush2.msra.mxu0 0.0
        %1387 = vmatprep.subr.mxu0 0.0
        %1388 = vmatpush2.msra.mxu0 0.0
        %1389 = vmatprep.subr.mxu0 0.0
        %1390 = vmatpush2.msra.mxu0 0.0
        %1391 = vmatprep.subr.mxu0 0.0
        %1392 = vmatpush2.msra.mxu0 0.0
        %1393 = vmatprep.subr.mxu0 0.0
        %1394 = vmatpush2.msra.mxu0 0.0
        %1395 = vmatprep.subr.mxu0 0.0
        %1396 = vmatpush2.msra.mxu0 0.0
        %1397 = vmatprep.subr.mxu0 0.0
        %1398 = vmatpush2.msra.mxu0 0.0
        %1399 = vmatprep.subr.mxu0 0.0
        %1400 = vmatpush2.msra.mxu0 0.0
        %1401 = vmatprep.subr.mxu0 0.0
        %1402 = vmatpush2.msra.mxu0 0.0
        %1403 = vmatprep.subr.mxu0 0.0
        %1404 = vmatpush2.msra.mxu0 0.0
        %1405 = vmatprep.subr.mxu0 0.0
        %1406 = vmatpush2.msra.mxu0 0.0
        %1407 = vmatprep.subr.mxu0 0.0
        %1408 = vmatpush2.msra.mxu0 0.0
        %1409 = vmatprep.subr.mxu0 0.0
        %1410 = vmatpush2.msra.mxu0 0.0
        %1411 = vmatprep.subr.mxu0 0.0
        %1412 = vmatpush2.msra.mxu0 0.0
        %1413 = vmatprep.subr.mxu0 0.0
        %1414 = vmatpush2.msra.mxu0 0.0
        %1415 = vmatprep.mubr.f32.mxu0 0.0
        %1416 = vmatmul.mubr.f32.gmra.mxu0 %v1343
        %v1417 = vpop.f32.mrf.mxu0
        %v1418 = vadd.f32 0.0, %v1417
        %v1419 = vpop.f32.mrf.mxu0
        %v1420 = vadd.f32 0.0, %v1419
        %1421 = vdwg.mxu0
        %1422 = vmatprep.subr.mxu0 0.0
        %1423 = vmatpush1.msra.mxu0 0.0
        %1424 = vmatprep.subr.mxu0 0.0
        %1425 = vmatpush1.msra.mxu0 0.0
        %1426 = vmatprep.subr.mxu0 0.0
        %1427 = vmatpush1.msra.mxu0 0.0
        %1428 = vmatprep.subr.mxu0 0.0
        %1429 = vmatpush1.msra.mxu0 0.0
        %1430 = vmatprep.subr.mxu0 0.0
        %1431 = vmatpush1.msra.mxu0 0.0
        %1432 = vmatprep.subr.mxu0 0.0
        %1433 = vmatpush1.msra.mxu0 0.0
        %1434 = vmatprep.subr.mxu0 0.0
        %1435 = vmatpush1.msra.mxu0 0.0
        %1436 = vmatprep.subr.mxu0 0.0
        %1437 = vmatpush1.msra.mxu0 0.0
        %1438 = vmatprep.subr.mxu0 0.0
        %1439 = vmatpush1.msra.mxu0 0.0
        %1440 = vmatprep.subr.mxu0 0.0
        %1441 = vmatpush1.msra.mxu0 0.0
        %1442 = vmatprep.subr.mxu0 0.0
        %1443 = vmatpush1.msra.mxu0 0.0
        %1444 = vmatprep.subr.mxu0 0.0
        %1445 = vmatpush1.msra.mxu0 0.0
        %1446 = vmatprep.subr.mxu0 0.0
        %1447 = vmatpush1.msra.mxu0 0.0
        %1448 = vmatprep.subr.mxu0 0.0
        %1449 = vmatpush1.msra.mxu0 0.0
        %1450 = vmatprep.subr.mxu0 0.0
        %1451 = vmatpush1.msra.mxu0 0.0
        %1452 = vmatprep.subr.mxu0 0.0
        %1453 = vmatpush1.msra.mxu0 %v1349
        %1454 = vmatprep.subr.mxu0 0.0
        %1455 = vmatpush2.msra.mxu0 0.0
        %1456 = vmatprep.subr.mxu0 0.0
        %1457 = vmatpush2.msra.mxu0 0.0
        %1458 = vmatprep.subr.mxu0 0.0
        %1459 = vmatpush2.msra.mxu0 0.0
        %1460 = vmatprep.subr.mxu0 0.0
        %1461 = vmatpush2.msra.mxu0 0.0
        %1462 = vmatprep.subr.mxu0 0.0
        %1463 = vmatpush2.msra.mxu0 0.0
        %1464 = vmatprep.subr.mxu0 0.0
        %1465 = vmatpush2.msra.mxu0 0.0
        %1466 = vmatprep.subr.mxu0 0.0
        %1467 = vmatpush2.msra.mxu0 0.0
        %1468 = vmatprep.subr.mxu0 0.0
        %1469 = vmatpush2.msra.mxu0 0.0
        %1470 = vmatprep.subr.mxu0 0.0
        %1471 = vmatpush2.msra.mxu0 0.0
        %1472 = vmatprep.subr.mxu0 0.0
        %1473 = vmatpush2.msra.mxu0 0.0
        %1474 = vmatprep.subr.mxu0 0.0
        %1475 = vmatpush2.msra.mxu0 0.0
        %1476 = vmatprep.subr.mxu0 0.0
        %1477 = vmatpush2.msra.mxu0 0.0
        %1478 = vmatprep.subr.mxu0 0.0
        %1479 = vmatpush2.msra.mxu0 0.0
        %1480 = vmatprep.subr.mxu0 0.0
        %1481 = vmatpush2.msra.mxu0 0.0
        %1482 = vmatprep.subr.mxu0 0.0
        %1483 = vmatpush2.msra.mxu0 0.0
        %1484 = vmatprep.subr.mxu0 0.0
        %1485 = vmatpush2.msra.mxu0 0.0
        %1486 = vmatprep.mubr.f32.mxu0 0.0
        %1487 = vmatmul.mubr.f32.gmra.mxu0 %v1343
        %v1488 = vpop.f32.mrf.mxu0
        %v1489 = vadd.f32 0.0, %v1488
        %v1490 = vpop.f32.mrf.mxu0
        %1491 = vdwg.mxu0
        %v1492 = vadd.f32 %v1325, %v1418
        %v1493 = vadd.f32 %v1326, %v1420
        %v1494 = vadd.f32 %v1327, %v1489
        %s1495 = scalar_lea.vmem %s1, 64
        %v1496 = vld [vmem:[%s1495] sm:$0xff]
        %1497 = vrot.lane.b32.xlu0 %v170, 90
        %v1498 = vpop.permute.xlu0 %1497
        %1499 = vrot.lane.b32.xlu0 %v177, 90
        %v1500 = vpop.permute.xlu0 %1499
        %1501 = vrot.lane.b32.xlu0 %v171, 90
        %v1502 = vpop.permute.xlu0 %1501
        %1503 = vrot.lane.b32.xlu0 %v178, 90
        %v1504 = vpop.permute.xlu0 %1503
        %vm1505 = vcmask 736256
        %v1506 = vsel %vm1505, %v1498, %v1500
        %v1507 = vsel %vm1505, %v1500, %v1502
        %v1508 = vsel %vm1505, %v1502, %v1504
        %v1510 = vsel %vm191, %v1496, 0
        %v1512 = vsel %vm195, %v1506, 0
        %v1514 = vsel %vm195, %v1507, 0
        %v1516 = vsel %vm195, %v1508, 0
        %1518 = vmatprep.subr.mxu0 0.0
        %1519 = vmatpush1.msra.mxu0 0.0
        %1520 = vmatprep.subr.mxu0 0.0
        %1521 = vmatpush1.msra.mxu0 0.0
        %1522 = vmatprep.subr.mxu0 0.0
        %1523 = vmatpush1.msra.mxu0 0.0
        %1524 = vmatprep.subr.mxu0 0.0
        %1525 = vmatpush1.msra.mxu0 0.0
        %1526 = vmatprep.subr.mxu0 0.0
        %1527 = vmatpush1.msra.mxu0 0.0
        %1528 = vmatprep.subr.mxu0 0.0
        %1529 = vmatpush1.msra.mxu0 0.0
        %1530 = vmatprep.subr.mxu0 0.0
        %1531 = vmatpush1.msra.mxu0 0.0
        %1532 = vmatprep.subr.mxu0 0.0
        %1533 = vmatpush1.msra.mxu0 0.0
        %1534 = vmatprep.subr.mxu0 0.0
        %1535 = vmatpush1.msra.mxu0 0.0
        %1536 = vmatprep.subr.mxu0 0.0
        %1537 = vmatpush1.msra.mxu0 0.0
        %1538 = vmatprep.subr.mxu0 0.0
        %1539 = vmatpush1.msra.mxu0 0.0
        %1540 = vmatprep.subr.mxu0 0.0
        %1541 = vmatpush1.msra.mxu0 0.0
        %1542 = vmatprep.subr.mxu0 0.0
        %1543 = vmatpush1.msra.mxu0 0.0
        %1544 = vmatprep.subr.mxu0 0.0
        %1545 = vmatpush1.msra.mxu0 0.0
        %1546 = vmatprep.subr.mxu0 0.0
        %1547 = vmatpush1.msra.mxu0 0.0
        %1548 = vmatprep.subr.mxu0 %v1514
        %1549 = vmatpush1.msra.mxu0 %v1512
        %1550 = vmatprep.subr.mxu0 0.0
        %1551 = vmatpush2.msra.mxu0 0.0
        %1552 = vmatprep.subr.mxu0 0.0
        %1553 = vmatpush2.msra.mxu0 0.0
        %1554 = vmatprep.subr.mxu0 0.0
        %1555 = vmatpush2.msra.mxu0 0.0
        %1556 = vmatprep.subr.mxu0 0.0
        %1557 = vmatpush2.msra.mxu0 0.0
        %1558 = vmatprep.subr.mxu0 0.0
        %1559 = vmatpush2.msra.mxu0 0.0
        %1560 = vmatprep.subr.mxu0 0.0
        %1561 = vmatpush2.msra.mxu0 0.0
        %1562 = vmatprep.subr.mxu0 0.0
        %1563 = vmatpush2.msra.mxu0 0.0
        %1564 = vmatprep.subr.mxu0 0.0
        %1565 = vmatpush2.msra.mxu0 0.0
        %1566 = vmatprep.subr.mxu0 0.0
        %1567 = vmatpush2.msra.mxu0 0.0
        %1568 = vmatprep.subr.mxu0 0.0
        %1569 = vmatpush2.msra.mxu0 0.0
        %1570 = vmatprep.subr.mxu0 0.0
        %1571 = vmatpush2.msra.mxu0 0.0
        %1572 = vmatprep.subr.mxu0 0.0
        %1573 = vmatpush2.msra.mxu0 0.0
        %1574 = vmatprep.subr.mxu0 0.0
        %1575 = vmatpush2.msra.mxu0 0.0
        %1576 = vmatprep.subr.mxu0 0.0
        %1577 = vmatpush2.msra.mxu0 0.0
        %1578 = vmatprep.subr.mxu0 0.0
        %1579 = vmatpush2.msra.mxu0 0.0
        %1580 = vmatprep.subr.mxu0 0.0
        %1581 = vmatpush2.msra.mxu0 0.0
        %1582 = vmatprep.mubr.f32.mxu0 0.0
        %1583 = vmatmul.mubr.f32.gmra.mxu0 %v1510
        %v1584 = vpop.f32.mrf.mxu0
        %v1585 = vadd.f32 0.0, %v1584
        %v1586 = vpop.f32.mrf.mxu0
        %v1587 = vadd.f32 0.0, %v1586
        %1588 = vdwg.mxu0
        %1589 = vmatprep.subr.mxu0 0.0
        %1590 = vmatpush1.msra.mxu0 0.0
        %1591 = vmatprep.subr.mxu0 0.0
        %1592 = vmatpush1.msra.mxu0 0.0
        %1593 = vmatprep.subr.mxu0 0.0
        %1594 = vmatpush1.msra.mxu0 0.0
        %1595 = vmatprep.subr.mxu0 0.0
        %1596 = vmatpush1.msra.mxu0 0.0
        %1597 = vmatprep.subr.mxu0 0.0
        %1598 = vmatpush1.msra.mxu0 0.0
        %1599 = vmatprep.subr.mxu0 0.0
        %1600 = vmatpush1.msra.mxu0 0.0
        %1601 = vmatprep.subr.mxu0 0.0
        %1602 = vmatpush1.msra.mxu0 0.0
        %1603 = vmatprep.subr.mxu0 0.0
        %1604 = vmatpush1.msra.mxu0 0.0
        %1605 = vmatprep.subr.mxu0 0.0
        %1606 = vmatpush1.msra.mxu0 0.0
        %1607 = vmatprep.subr.mxu0 0.0
        %1608 = vmatpush1.msra.mxu0 0.0
        %1609 = vmatprep.subr.mxu0 0.0
        %1610 = vmatpush1.msra.mxu0 0.0
        %1611 = vmatprep.subr.mxu0 0.0
        %1612 = vmatpush1.msra.mxu0 0.0
        %1613 = vmatprep.subr.mxu0 0.0
        %1614 = vmatpush1.msra.mxu0 0.0
        %1615 = vmatprep.subr.mxu0 0.0
        %1616 = vmatpush1.msra.mxu0 0.0
        %1617 = vmatprep.subr.mxu0 0.0
        %1618 = vmatpush1.msra.mxu0 0.0
        %1619 = vmatprep.subr.mxu0 0.0
        %1620 = vmatpush1.msra.mxu0 %v1516
        %1621 = vmatprep.subr.mxu0 0.0
        %1622 = vmatpush2.msra.mxu0 0.0
        %1623 = vmatprep.subr.mxu0 0.0
        %1624 = vmatpush2.msra.mxu0 0.0
        %1625 = vmatprep.subr.mxu0 0.0
        %1626 = vmatpush2.msra.mxu0 0.0
        %1627 = vmatprep.subr.mxu0 0.0
        %1628 = vmatpush2.msra.mxu0 0.0
        %1629 = vmatprep.subr.mxu0 0.0
        %1630 = vmatpush2.msra.mxu0 0.0
        %1631 = vmatprep.subr.mxu0 0.0
        %1632 = vmatpush2.msra.mxu0 0.0
        %1633 = vmatprep.subr.mxu0 0.0
        %1634 = vmatpush2.msra.mxu0 0.0
        %1635 = vmatprep.subr.mxu0 0.0
        %1636 = vmatpush2.msra.mxu0 0.0
        %1637 = vmatprep.subr.mxu0 0.0
        %1638 = vmatpush2.msra.mxu0 0.0
        %1639 = vmatprep.subr.mxu0 0.0
        %1640 = vmatpush2.msra.mxu0 0.0
        %1641 = vmatprep.subr.mxu0 0.0
        %1642 = vmatpush2.msra.mxu0 0.0
        %1643 = vmatprep.subr.mxu0 0.0
        %1644 = vmatpush2.msra.mxu0 0.0
        %1645 = vmatprep.subr.mxu0 0.0
        %1646 = vmatpush2.msra.mxu0 0.0
        %1647 = vmatprep.subr.mxu0 0.0
        %1648 = vmatpush2.msra.mxu0 0.0
        %1649 = vmatprep.subr.mxu0 0.0
        %1650 = vmatpush2.msra.mxu0 0.0
        %1651 = vmatprep.subr.mxu0 0.0
        %1652 = vmatpush2.msra.mxu0 0.0
        %1653 = vmatprep.mubr.f32.mxu0 0.0
        %1654 = vmatmul.mubr.f32.gmra.mxu0 %v1510
        %v1655 = vpop.f32.mrf.mxu0
        %v1656 = vadd.f32 0.0, %v1655
        %v1657 = vpop.f32.mrf.mxu0
        %1658 = vdwg.mxu0
        %v1659 = vadd.f32 %v1492, %v1585
        %v1660 = vadd.f32 %v1493, %v1587
        %v1661 = vadd.f32 %v1494, %v1656
        %v1663 = vlaneseq
        %v1664 = vshrl.u32 %v1663, 7
        %v1665 = vsub.s32 0, %v1664
        %v1666 = vrot.slane %v169, %v1665
        %v1667 = vlaneseq
        %v1668 = vshrl.u32 %v1667, 7
        %v1669 = vsub.s32 1, %v1668
        %v1670 = vrot.slane %v169, %v1669
        %v1671 = vlaneseq
        %v1672 = vshrl.u32 %v1671, 7
        %v1673 = vsub.s32 2, %v1672
        %v1674 = vrot.slane %v169, %v1673
        %v1678 = vmul.f32 %v1659, %v1666
        %v1679 = vmul.f32 %v1660, %v1670
        %v1680 = vmul.f32 %v1661, %v1674
        %v1681 = vadd.f32 %v1678, %v1679
        %v1682 = vadd.f32 %v1681, %v1680
        %1683 = vadd.xlane.f32.xlu0 %v1682
        %v1684 = vpop.xlane.xlu0 %1683
        %v1685 = vmul.f32 %v1684, 0.00390625
        %v1686 = vsub.f32 %v1659, %v1685
        %v1687 = vsub.f32 %v1660, %v1685
        %v1688 = vsub.f32 %v1661, %v1685
        %v1689 = vmul.f32 %v1686, %v1666
        %v1690 = vmul.f32 %v1687, %v1670
        %v1691 = vmul.f32 %v1688, %v1674
        %v1692 = vmul.f32 %v1689, %v1689
        %v1693 = vmul.f32 %v1690, %v1690
        %v1694 = vmul.f32 %v1691, %v1691
        %v1695 = vadd.f32 %v1692, %v1693
        %v1696 = vadd.f32 %v1695, %v1694
        %1697 = vadd.xlane.f32.xlu0 %v1696
        %v1698 = vpop.xlane.xlu0 %1697
        %v1699 = vmul.f32 %v1698, 0.00390625
        %v1700 = vadd.f32 %v1699, 1e-05
        %v1701 = vrsqrt.pop %v1700
        %v1702 = vmul.f32 %v1686, %v1701
        %v1703 = vmul.f32 %v1687, %v1701
        %v1704 = vmul.f32 %v1688, %v1701
        %v1705 = vmax.f32 %v1702, 0.0
        %v1706 = vmax.f32 %v1703, 0.0
        %v1707 = vmax.f32 %v1704, 0.0
        %1708 = vst [vmem:[%s163] sm:$0xff] %v1705
        %1709 = vst [vmem:[%s163 + $0x8] sm:$0xff] %v1706
        %1710 = vst [vmem:[%s163 + $0x10] sm:$0xff] %v1707
        %s1711 = sand.u32 %s93, 1
        %s1712 = scalar_lea.sflag [#allocation3], %s1711
        %s1713 = sand.u32 %s93, 1
        %s1714 = smul.addr %s1713, 24
        %s1715 = scalar_lea.vmem [#allocation2], %s1714
        // Predicated region
        $region33: #{tpu_custom_call.1} parent=31 // pred_check
          %p1716 = pneg %p103
        $region34: #{tpu_custom_call.1} parent=31 // pred_check_branch
          %1718 = sbr.rel (%p1716) target = $region36
        $region35: #{tpu_custom_call.1} parent=31 // pred_region
          %s1720 = ssub.s32 384, 384
          %1721 = vsyncadd %s1712, %s1720
          %s1722 = smul.addr %s17, 3
          %s1723 = smul.addr %s1722, 128
          %s1724 = scalar_lea.hbm %s3, %s1723
          %s1726 = sshll.u32 %s1715, 4
          %s1727 = int_to_ptr.vmem [resolvable:$true] %s1726
          %1729 = dma.vmem_to_hbm [thread:$0]  %s1727, 384, %s1724, %s1712
        $region36: #{tpu_custom_call.1} parent=31 // pred_fallthru
          _
      $region32: #{tpu_custom_call.1} parent=5 // pred_fallthru
        _
      %p1730 = scmp.le.s32.totalorder 2, %s12
      // Predicated region
      $region37: #{tpu_custom_call.1} parent=5 // pred_check
        %p1731 = pneg %p1730
      $region38: #{tpu_custom_call.1} parent=5 // pred_check_branch
        %1733 = sbr.rel (%p1731) target = $region40
      $region39: #{tpu_custom_call.1} parent=5 // pred_region
        %s1734 = ssub.s32 %s12, 2
        // Predicated region
        $region41: #{tpu_custom_call.1} parent=39 // pred_check
          %p1735 = pneg %p109
        $region42: #{tpu_custom_call.1} parent=39 // pred_check_branch
          %1737 = sbr.rel (%p1735) target = $region44
        $region43: #{tpu_custom_call.1} parent=39 // pred_region
          %s1738 = sand.u32 %s94, 1
          %s1739 = scalar_lea.sflag [#allocation3], %s1738
          %s1740 = sand.u32 %s94, 1
          %s1741 = smul.addr %s1740, 24
          %s1742 = scalar_lea.vmem [#allocation2], %s1741
          %1743 = dma.done %s1739, 384
        $region44: #{tpu_custom_call.1} parent=39 // pred_fallthru
          _
      $region40: #{tpu_custom_call.1} parent=5 // pred_fallthru
        _
    $region6: #{tpu_custom_call.1} parent=1 // loop_footer
      %s16 = sadd.s32 1, %s12
    $region7: #{tpu_custom_call.1} parent=1 // loop_footer_branch
      %11 = sbr.rel target = $region3
    $region8: #{tpu_custom_call.1} parent=1 // loop_exit
      _
    %1744 = vsyncpa [#allocation3], 1
    %s1745 = scalar_lea.sflag [#allocation3], 1
    %1746 = vsyncpa %s1745, 1

</llo_original>
